<compile_context>
chip_gen: v7x
topology: tpu7x:2x2x1
jax: 0.10.0
libtpu: 0.0.40
codegen_flags: <defaults>
</compile_context>

<pallas_src>
import jax
import jax.numpy as jnp
from jax.experimental import pallas as pl
from jax.experimental.pallas import tpu as pltpu


def coordatt_kernel(x_ref, w1t_ref, b1_ref, wht_ref, bh_ref, wwt_ref, bw_ref,
                    o_ref):
    nb, H, W, C = x_ref.shape
    mip = w1t_ref.shape[1]

    # ---- pooling: AdaptiveAvgPool2d((None,1)) / ((1,None)) ----
    # f32 accumulation; the cast is scoped to this phase only so the converted
    # copy is not kept live across the apply phase.
    xf = x_ref[...].astype(jnp.float32)
    pooled_h = jnp.mean(xf, axis=2)                        # (Nb, H, C)
    pooled_w = jnp.mean(xf, axis=1)                        # (Nb, W, C)

    # ---- conv1 (BN folded) + h_swish, both pooled paths in one matmul ----
    # Row-axis (sublane) stack: no lane relayout, one MXU push/drain.
    y = jnp.concatenate([pooled_h, pooled_w], axis=1)      # (Nb, H+W, C)
    y = y.reshape(nb * (H + W), C)
    y = jnp.dot(y, w1t_ref[...],
                preferred_element_type=jnp.float32) + b1_ref[...]
    y = y * jnp.clip(y + 3.0, 0.0, 6.0) * (1.0 / 6.0)      # h_swish
    y = y.reshape(nb, H + W, mip)
    yh = y[:, :H, :].reshape(nb * H, mip)
    yw = y[:, H:, :].reshape(nb * W, mip)

    # ---- conv_h / conv_w (1x1) + sigmoid -> per-row / per-column gates ----
    a_h = jax.nn.sigmoid(
        jnp.dot(yh, wht_ref[...], preferred_element_type=jnp.float32)
        + bh_ref[...]).reshape(nb, H, 1, C)
    a_w = jax.nn.sigmoid(
        jnp.dot(yw, wwt_ref[...], preferred_element_type=jnp.float32)
        + bw_ref[...]).reshape(nb, 1, W, C)

    # ---- apply: out[n,h,w,c] = x[n,h,w,c] * a_h[n,h,c] * a_w[n,w,c] ----
    # Done in the input dtype: no full-tile f32 materialization.
    x = x_ref[...]
    o_ref[...] = x * a_h.astype(x.dtype) * a_w.astype(x.dtype)


def _vmem_capacity_bytes():
    try:
        cap = getattr(pltpu.get_tpu_info(), "vmem_capacity_bytes", None)
        if cap:
            return int(cap)
    except Exception:
        pass
    return 64 << 20  # conservative fallback = v7x physical VMEM


def coord_att_nhwc(x, params):
    """x: (N, H, W, C) channels-last. Returns same shape/dtype."""
    N, H, W, C = x.shape
    w1 = params["w1"]; b1 = params["b1"]
    scale = params["bn_scale"]; shift = params["bn_shift"]
    wh = params["wh"]; bh = params["bh"]
    ww = params["ww"]; bw = params["bw"]
    mip = w1.shape[0]
    oup = wh.shape[0]
    if not (oup == C and w1.shape[1] == C and ww.shape[0] == oup):
        raise ValueError(
            "CoordAtt requires oup == inp == C for the final gating broadcast "
            f"(got inp={w1.shape[1]}, oup={oup}, C={C})")

    # Fold BatchNorm (eval mode) into conv1; store weights as (in, out) so the
    # in-kernel contraction is over the lane (channel) axis.
    w1t = (scale * w1).T.astype(jnp.float32)                   # (C, mip)
    b1f = (scale * b1 + shift).reshape(1, mip).astype(jnp.float32)
    wht = wh.T.astype(jnp.float32)                             # (mip, oup)
    bhf = bh.reshape(1, oup).astype(jnp.float32)
    wwt = ww.T.astype(jnp.float32)                             # (mip, oup)
    bwf = bw.reshape(1, oup).astype(jnp.float32)

    itemsize = jnp.dtype(x.dtype).itemsize
    # Per batch element: double-buffered input + output tiles plus the f32
    # pooling temporary (counted even for bf16 inputs).
    per_item_bytes = H * W * C * (4 * itemsize + 4)
    weight_bytes = 4 * (w1t.size + b1f.size + wht.size + bhf.size
                        + wwt.size + bwf.size)
    headroom = (2 << 20) + 2 * weight_bytes

    # Generation-aware VMEM budget (~20% headroom off physical capacity).
    vmem_budget = int(_vmem_capacity_bytes() * 0.8)

    # Batch as many N per grid step as fit; keep the grid evenly divisible.
    nb = max(1, min(N, (vmem_budget - headroom) // per_item_bytes))
    while N % nb:
        nb -= 1
    # TODO(synk): when nb == 1 still overflows the budget, fall back to the
    # pooling-pass + H-tiled apply-pass design described at the top.

    vmem_needed = nb * per_item_bytes + headroom
    vmem_limit = int(min(vmem_budget, max(vmem_needed, 16 << 20)))

    matmul_flops = 2 * N * (H + W) * (C * mip + mip * oup)
    elementwise_flops = 4 * N * H * W * C   # pooling adds + 2-gate apply
    cost = pl.CostEstimate(
        flops=int(matmul_flops + elementwise_flops),
        transcendentals=int(N * (H + W) * oup),
        bytes_accessed=int(2 * N * H * W * C * itemsize + weight_bytes),
    )

    def const(shape):
        return pl.BlockSpec(shape, lambda i: (0,) * len(shape))

    return pl.pallas_call(
        coordatt_kernel,
        out_shape=jax.ShapeDtypeStruct((N, H, W, C), x.dtype),
        grid=(N // nb,),
        in_specs=[
            pl.BlockSpec((nb, H, W, C), lambda i: (i, 0, 0, 0)),
            const((C, mip)),     # conv1 weight (BN folded), (in, out)
            const((1, mip)),     # conv1 bias (BN folded)
            const((mip, oup)),   # conv_h weight, (in, out)
            const((1, oup)),     # conv_h bias
            const((mip, oup)),   # conv_w weight, (in, out)
            const((1, oup)),     # conv_w bias
        ],
        out_specs=pl.BlockSpec((nb, H, W, C), lambda i: (i, 0, 0, 0)),
        compiler_params=pltpu.CompilerParams(
            dimension_semantics=("parallel",),
            vmem_limit_bytes=vmem_limit),
        cost_estimate=cost,
    )(x, w1t, b1f, wht, bhf, wwt, bwf)


def coord_att(x, params):
    """x: (N, C, H, W) NCHW, matching the PyTorch module interface.

    NOTE: the two XLA transposes below each re-read/write x in HBM, so this
    path moves ~3x the bytes of the kernel itself.  In a channels-last model
    call coord_att_nhwc directly (the transposes disappear).
    """
    x_nhwc = jnp.transpose(x, (0, 2, 3, 1))
    out_nhwc = coord_att_nhwc(x_nhwc, params)
    return jnp.transpose(out_nhwc, (0, 3, 1, 2))


def init_params(key, inp, oup, reduction=32):
    mip = max(8, inp // reduction)
    ks = jax.random.split(key, 8)
    f32 = jnp.float32
    # 1x1 conv weights stored as (out_ch, in_ch); biases as (out_ch, 1)
    w1 = jax.random.normal(ks[0], (mip, inp), f32) * 0.1
    b1 = jax.random.normal(ks[1], (mip, 1), f32) * 0.1
    # BatchNorm2d (eval mode): gamma, beta, running_mean, running_var
    gamma = 1.0 + 0.05 * jax.random.normal(ks[2], (mip, 1), f32)
    beta = 0.05 * jax.random.normal(ks[3], (mip, 1), f32)
    running_mean = 0.05 * jax.random.normal(ks[4], (mip, 1), f32)
    running_var = jnp.abs(1.0 + 0.05 * jax.random.normal(ks[5], (mip, 1), f32))
    eps = 1e-5
    bn_scale = gamma / jnp.sqrt(running_var + eps)
    bn_shift = beta - running_mean * bn_scale
    wh = jax.random.normal(ks[6], (oup, mip), f32) * 0.1
    bh = jnp.zeros((oup, 1), f32)
    ww = jax.random.normal(ks[7], (oup, mip), f32) * 0.1
    bw = jnp.zeros((oup, 1), f32)
    return dict(w1=w1, b1=b1, bn_scale=bn_scale, bn_shift=bn_shift,
                wh=wh, bh=bh, ww=ww, bw=bw)


def coord_att_reference(x, params):
    """Pure-JAX reference mirroring the PyTorch forward (NCHW, BN in eval)."""
    N, C, H, W = x.shape
    prec = jax.lax.Precision.HIGHEST
    x_h = jnp.mean(x, axis=3)                      # (N, C, H)
    x_w = jnp.mean(x, axis=2)                      # (N, C, W)
    y = jnp.concatenate([x_h, x_w], axis=2)        # (N, C, H+W)
    y = jnp.einsum("mc,ncl->nml", params["w1"], y, precision=prec) + params["b1"][None]
    y = y * params["bn_scale"][None] + params["bn_shift"][None]
    y = y * jnp.clip(y + 3.0, 0.0, 6.0) / 6.0
    yh, yw = y[:, :, :H], y[:, :, H:]
    a_h = jax.nn.sigmoid(
        jnp.einsum("om,nml->nol", params["wh"], yh, precision=prec) + params["bh"][None])
    a_w = jax.nn.sigmoid(
        jnp.einsum("om,nml->nol", params["ww"], yw, precision=prec) + params["bw"][None])
    return x * a_w[:, :, None, :] * a_h[:, :, :, None]


if __name__ == "__main__":
    # C = 128 so the channels-last tile is lane-dense (production CoordAtt
    # configs); spatial kept small and N=4 so batched grid steps are exercised.
    N, C, H, W = 4, 128, 16, 16
    inp = oup = C
    key = jax.random.PRNGKey(0)
    kx, kp = jax.random.split(key)
    x = jax.random.normal(kx, (N, C, H, W), jnp.float32)
    params = init_params(kp, inp, oup, reduction=32)

    out = jax.block_until_ready(coord_att(x, params))

    ref = coord_att_reference(x, params)
    # Kernel uses default MXU matmul precision (per perf review) while the
    # reference runs f32-HIGHEST, so allow single-pass-bf16-level tolerance
    # on the gates (gates are sigmoid-bounded; output error stays ~1e-2).
    if not jnp.allclose(out, ref, atol=2e-2, rtol=2e-2):
        max_err = float(jnp.max(jnp.abs(out - ref)))
        raise AssertionError(
            f"Pallas CoordAtt output mismatch vs reference (max abs err {max_err})")
    print("KERNEL_OK")
</pallas_src>

<mosaic_0001>
module attributes {stable_mosaic.version = 11 : i64} {
  func.func @coordatt_kernel(%arg0: i32, %arg1: memref<4x16x16x128xf32, #tpu.memory_space<vmem>>, %arg2: memref<128x8xf32, #tpu.memory_space<vmem>>, %arg3: memref<1x8xf32, #tpu.memory_space<vmem>>, %arg4: memref<8x128xf32, #tpu.memory_space<vmem>>, %arg5: memref<1x128xf32, #tpu.memory_space<vmem>>, %arg6: memref<8x128xf32, #tpu.memory_space<vmem>>, %arg7: memref<1x128xf32, #tpu.memory_space<vmem>>, %arg8: memref<4x16x16x128xf32, #tpu.memory_space<vmem>>) attributes {dimension_semantics = [#tpu.dimension_semantics<parallel>], iteration_bounds = array<i64: 1>, scalar_prefetch = 0 : i64, scratch_operands = 0 : i64, tpu.core_type = #tpu.core_type<tc>, window_params = [{transform_indices = @transform_0, window_bounds = array<i64: 4, 16, 16, 128>}, {pipeline_mode = #tpu.pipeline_mode<synchronous>, transform_indices = @transform_1, window_bounds = array<i64: 128, 8>}, {pipeline_mode = #tpu.pipeline_mode<synchronous>, transform_indices = @transform_2, window_bounds = array<i64: 1, 8>}, {pipeline_mode = #tpu.pipeline_mode<synchronous>, transform_indices = @transform_3, window_bounds = array<i64: 8, 128>}, {pipeline_mode = #tpu.pipeline_mode<synchronous>, transform_indices = @transform_4, window_bounds = array<i64: 1, 128>}, {pipeline_mode = #tpu.pipeline_mode<synchronous>, transform_indices = @transform_5, window_bounds = array<i64: 8, 128>}, {pipeline_mode = #tpu.pipeline_mode<synchronous>, transform_indices = @transform_6, window_bounds = array<i64: 1, 128>}, {transform_indices = @transform_7, window_bounds = array<i64: 4, 16, 16, 128>}]} {
    %c0 = arith.constant 0 : index
    %c0_0 = arith.constant 0 : index
    %c0_1 = arith.constant 0 : index
    %c0_2 = arith.constant 0 : index
    %0 = vector.load %arg1[%c0, %c0_0, %c0_1, %c0_2] : memref<4x16x16x128xf32, #tpu.memory_space<vmem>>, vector<4x16x16x128xf32>
    %cst = arith.constant dense<0.000000e+00> : vector<4x16x128xf32>
    %1 = vector.multi_reduction <add>, %0, %cst [2] : vector<4x16x16x128xf32> to vector<4x16x128xf32>
    %cst_3 = arith.constant 1.600000e+01 : f32
    %2 = vector.broadcast %cst_3 : f32 to vector<4x16x128xf32>
    %3 = arith.divf %1, %2 : vector<4x16x128xf32>
    %cst_4 = arith.constant dense<0.000000e+00> : vector<4x16x128xf32>
    %4 = vector.multi_reduction <add>, %0, %cst_4 [1] : vector<4x16x16x128xf32> to vector<4x16x128xf32>
    %cst_5 = arith.constant 1.600000e+01 : f32
    %5 = vector.broadcast %cst_5 : f32 to vector<4x16x128xf32>
    %6 = arith.divf %4, %5 : vector<4x16x128xf32>
    %7 = tpu.concatenate %3, %6 in 1 : vector<4x16x128xf32>, vector<4x16x128xf32> -> vector<4x32x128xf32>
    %8 = vector.shape_cast %7 : vector<4x32x128xf32> to vector<128x128xf32>
    %c0_6 = arith.constant 0 : index
    %c0_7 = arith.constant 0 : index
    %9 = vector.load %arg2[%c0_6, %c0_7] : memref<128x8xf32, #tpu.memory_space<vmem>>, vector<128x8xf32>
    %cst_8 = arith.constant dense<0.000000e+00> : vector<128x8xf32>
    %10 = tpu.matmul %8, %9, %cst_8 {dimension_numbers = #tpu.dot_dimension_numbers<[1], [0], [0], [1], [0, 0, 1, 1], [], []>} : vector<128x128xf32>, vector<128x8xf32>, vector<128x8xf32> -> vector<128x8xf32>
    %c0_9 = arith.constant 0 : index
    %c0_10 = arith.constant 0 : index
    %11 = vector.load %arg3[%c0_9, %c0_10] : memref<1x8xf32, #tpu.memory_space<vmem>>, vector<1x8xf32>
    %12 = vector.broadcast %11 : vector<1x8xf32> to vector<128x8xf32>
    %13 = arith.addf %10, %12 : vector<128x8xf32>
    %cst_11 = arith.constant 3.000000e+00 : f32
    %14 = vector.broadcast %cst_11 : f32 to vector<128x8xf32>
    %15 = arith.addf %13, %14 : vector<128x8xf32>
    %cst_12 = arith.constant 0.000000e+00 : f32
    %cst_13 = arith.constant 6.000000e+00 : f32
    %16 = vector.broadcast %cst_12 : f32 to vector<128x8xf32>
    %17 = arith.maximumf %16, %15 : vector<128x8xf32>
    %18 = vector.broadcast %cst_13 : f32 to vector<128x8xf32>
    %19 = arith.minimumf %18, %17 : vector<128x8xf32>
    %20 = arith.mulf %13, %19 : vector<128x8xf32>
    %cst_14 = arith.constant 0.166666672 : f32
    %21 = vector.broadcast %cst_14 : f32 to vector<128x8xf32>
    %22 = arith.mulf %20, %21 : vector<128x8xf32>
    %23 = vector.shape_cast %22 : vector<128x8xf32> to vector<4x32x8xf32>
    %24 = vector.extract_strided_slice %23 {offsets = [0, 0, 0], sizes = [4, 16, 8], strides = [1, 1, 1]} : vector<4x32x8xf32> to vector<4x16x8xf32>
    %25 = vector.shape_cast %24 : vector<4x16x8xf32> to vector<64x8xf32>
    %26 = vector.extract_strided_slice %23 {offsets = [0, 16, 0], sizes = [4, 16, 8], strides = [1, 1, 1]} : vector<4x32x8xf32> to vector<4x16x8xf32>
    %27 = vector.shape_cast %26 : vector<4x16x8xf32> to vector<64x8xf32>
    %c0_15 = arith.constant 0 : index
    %c0_16 = arith.constant 0 : index
    %28 = vector.load %arg4[%c0_15, %c0_16] : memref<8x128xf32, #tpu.memory_space<vmem>>, vector<8x128xf32>
    %cst_17 = arith.constant dense<0.000000e+00> : vector<64x128xf32>
    %29 = tpu.matmul %25, %28, %cst_17 {dimension_numbers = #tpu.dot_dimension_numbers<[1], [0], [0], [1], [0, 0, 1, 1], [], []>} : vector<64x8xf32>, vector<8x128xf32>, vector<64x128xf32> -> vector<64x128xf32>
    %c0_18 = arith.constant 0 : index
    %c0_19 = arith.constant 0 : index
    %30 = vector.load %arg5[%c0_18, %c0_19] : memref<1x128xf32, #tpu.memory_space<vmem>>, vector<1x128xf32>
    %31 = vector.broadcast %30 : vector<1x128xf32> to vector<64x128xf32>
    %32 = arith.addf %29, %31 : vector<64x128xf32>
    %33 = arith.negf %32 : vector<64x128xf32>
    %34 = math.exp %33 : vector<64x128xf32>
    %cst_20 = arith.constant 1.000000e+00 : f32
    %35 = vector.broadcast %cst_20 : f32 to vector<64x128xf32>
    %36 = arith.addf %35, %34 : vector<64x128xf32>
    %37 = arith.divf %35, %36 : vector<64x128xf32>
    %38 = vector.shape_cast %37 : vector<64x128xf32> to vector<4x16x1x128xf32>
    %c0_21 = arith.constant 0 : index
    %c0_22 = arith.constant 0 : index
    %39 = vector.load %arg6[%c0_21, %c0_22] : memref<8x128xf32, #tpu.memory_space<vmem>>, vector<8x128xf32>
    %cst_23 = arith.constant dense<0.000000e+00> : vector<64x128xf32>
    %40 = tpu.matmul %27, %39, %cst_23 {dimension_numbers = #tpu.dot_dimension_numbers<[1], [0], [0], [1], [0, 0, 1, 1], [], []>} : vector<64x8xf32>, vector<8x128xf32>, vector<64x128xf32> -> vector<64x128xf32>
    %c0_24 = arith.constant 0 : index
    %c0_25 = arith.constant 0 : index
    %41 = vector.load %arg7[%c0_24, %c0_25] : memref<1x128xf32, #tpu.memory_space<vmem>>, vector<1x128xf32>
    %42 = vector.broadcast %41 : vector<1x128xf32> to vector<64x128xf32>
    %43 = arith.addf %40, %42 : vector<64x128xf32>
    %44 = arith.negf %43 : vector<64x128xf32>
    %45 = math.exp %44 : vector<64x128xf32>
    %cst_26 = arith.constant 1.000000e+00 : f32
    %46 = vector.broadcast %cst_26 : f32 to vector<64x128xf32>
    %47 = arith.addf %46, %45 : vector<64x128xf32>
    %48 = arith.divf %46, %47 : vector<64x128xf32>
    %49 = vector.shape_cast %48 : vector<64x128xf32> to vector<4x1x16x128xf32>
    %c0_27 = arith.constant 0 : index
    %c0_28 = arith.constant 0 : index
    %c0_29 = arith.constant 0 : index
    %c0_30 = arith.constant 0 : index
    %50 = vector.load %arg1[%c0_27, %c0_28, %c0_29, %c0_30] : memref<4x16x16x128xf32, #tpu.memory_space<vmem>>, vector<4x16x16x128xf32>
    %51 = vector.broadcast %38 : vector<4x16x1x128xf32> to vector<4x16x16x128xf32>
    %52 = arith.mulf %50, %51 : vector<4x16x16x128xf32>
    %53 = vector.broadcast %49 : vector<4x1x16x128xf32> to vector<4x16x16x128xf32>
    %54 = arith.mulf %52, %53 : vector<4x16x16x128xf32>
    %c0_31 = arith.constant 0 : index
    %c0_32 = arith.constant 0 : index
    %c0_33 = arith.constant 0 : index
    %c0_34 = arith.constant 0 : index
    %55 = vector.load %arg8[%c0_31, %c0_32, %c0_33, %c0_34] : memref<4x16x16x128xf32, #tpu.memory_space<vmem>>, vector<4x16x16x128xf32>
    tpu.vector_store %arg8[%c0_31, %c0_32, %c0_33, %c0_34], %54 {strides = array<i32>} : memref<4x16x16x128xf32, #tpu.memory_space<vmem>>, vector<4x16x16x128xf32>,
    return
  }
  func.func @transform_0(%arg0: i32) -> (i32, i32, i32, i32) {
    %c0_i32 = arith.constant 0 : i32
    %c0_i32_0 = arith.constant 0 : i32
    %c0_i32_1 = arith.constant 0 : i32
    %c0_i32_2 = arith.constant 0 : i32
    return %arg0, %c0_i32, %c0_i32_0, %c0_i32_1 : i32, i32, i32, i32
  }
  func.func @transform_1(%arg0: i32) -> (i32, i32) {
    %c0_i32 = arith.constant 0 : i32
    %c0_i32_0 = arith.constant 0 : i32
    %c0_i32_1 = arith.constant 0 : i32
    return %c0_i32, %c0_i32_0 : i32, i32
  }
  func.func @transform_2(%arg0: i32) -> (i32, i32) {
    %c0_i32 = arith.constant 0 : i32
    %c0_i32_0 = arith.constant 0 : i32
    %c0_i32_1 = arith.constant 0 : i32
    return %c0_i32, %c0_i32_0 : i32, i32
  }
  func.func @transform_3(%arg0: i32) -> (i32, i32) {
    %c0_i32 = arith.constant 0 : i32
    %c0_i32_0 = arith.constant 0 : i32
    %c0_i32_1 = arith.constant 0 : i32
    return %c0_i32, %c0_i32_0 : i32, i32
  }
  func.func @transform_4(%arg0: i32) -> (i32, i32) {
    %c0_i32 = arith.constant 0 : i32
    %c0_i32_0 = arith.constant 0 : i32
    %c0_i32_1 = arith.constant 0 : i32
    return %c0_i32, %c0_i32_0 : i32, i32
  }
  func.func @transform_5(%arg0: i32) -> (i32, i32) {
    %c0_i32 = arith.constant 0 : i32
    %c0_i32_0 = arith.constant 0 : i32
    %c0_i32_1 = arith.constant 0 : i32
    return %c0_i32, %c0_i32_0 : i32, i32
  }
  func.func @transform_6(%arg0: i32) -> (i32, i32) {
    %c0_i32 = arith.constant 0 : i32
    %c0_i32_0 = arith.constant 0 : i32
    %c0_i32_1 = arith.constant 0 : i32
    return %c0_i32, %c0_i32_0 : i32, i32
  }
  func.func @transform_7(%arg0: i32) -> (i32, i32, i32, i32) {
    %c0_i32 = arith.constant 0 : i32
    %c0_i32_0 = arith.constant 0 : i32
    %c0_i32_1 = arith.constant 0 : i32
    %c0_i32_2 = arith.constant 0 : i32
    return %arg0, %c0_i32, %c0_i32_0, %c0_i32_1 : i32, i32, i32, i32
  }
}

</mosaic_0001>

<llo_original>
// kernel: tpu_custom_call.1
$region0: #{tpu_custom_call.1}
  #allocation0 [shape = 'u32[]', space=smem, size = 0x4, offset = 0x4, fixed_abs, tag = 'smem constant byte address 0x4 - core index']
  #allocation1 [shape = 'u32[144,128]{1,0:T(1,128)}', space=vmem, size = 0x12000, scoped, tag = 'internal scratch']
  %s0 = inlined_call_operand.hbm [shape: f32[4,16,16,128], index: 0, kind: input, shape index: {}]
  %s1 = inlined_call_operand.vmem [shape: f32[128,8], index: 1, kind: input, shape index: {}]
  %s2 = inlined_call_operand.vmem [shape: f32[1,8], index: 2, kind: input, shape index: {}]
  %s3 = inlined_call_operand.vmem [shape: f32[8,128], index: 3, kind: input, shape index: {}]
  %s4 = inlined_call_operand.vmem [shape: f32[1,128], index: 4, kind: input, shape index: {}]
  %s5 = inlined_call_operand.vmem [shape: f32[8,128], index: 5, kind: input, shape index: {}]
  %s6 = inlined_call_operand.vmem [shape: f32[1,128], index: 6, kind: input, shape index: {}]
  %s7 = inlined_call_operand.hbm [shape: f32[4,16,16,128], index: 7, kind: output, shape index: {}]
  %s8 = sld [smem:[#allocation0]]
  $region42: #{tpu_custom_call.1} parent=0
    _
  %s10 = ssub.s32 1, %s8
  %s11 = scalar_select 0, %s10, %s8
  $region1: #{tpu_custom_call.1} parent=0
    #allocation2 [shape = 'u8[524288]{0}', space=vmem, size = 0x80000, scoped, tag = 'input window, operand 0, single buffered']
    #allocation3 [shape = 's32[1]{0}', space=sflag, size = 0x4, scoped, tag = 'scoped memory for tpu_custom_call.1']
    #allocation4 [shape = 's32[1]{0}', space=sflag, size = 0x4, scoped, tag = 'scoped memory for tpu_custom_call.1']
    #allocation5 [shape = 'u8[524288]{0}', space=vmem, size = 0x80000, scoped, tag = 'output window, operand 0, single buffered']
    %12 = vsyncpa [#allocation3], 0
    %13 = vsyncpa [#allocation4], 0
    // Predicated region
    $region2: #{tpu_custom_call.1} parent=1 // pred_check
      _
    $region3: #{tpu_custom_call.1} parent=1 // pred_check_branch
      %15 = sbr.rel (0) target = $region5
    $region4: #{tpu_custom_call.1} parent=1 // pred_region
      %s17 = ssub.s32 16384, 16384
      %18 = vsyncadd [#allocation3], %s17
      %s19 = sshll.u32 [#allocation2], 4
      %s20 = int_to_ptr.vmem [resolvable:$true] %s19
      %25 = dma.hbm_to_vmem [thread:$0]  %s0, 16384, %s20, [#allocation3], 128, 128, 8
    $region5: #{tpu_custom_call.1} parent=1 // pred_fallthru
      _
    // Predicated region
    $region6: #{tpu_custom_call.1} parent=1 // pred_check
      _
    $region7: #{tpu_custom_call.1} parent=1 // pred_check_branch
      %27 = sbr.rel (0) target = $region9
    $region8: #{tpu_custom_call.1} parent=1 // pred_region
      _
    $region9: #{tpu_custom_call.1} parent=1 // pred_fallthru
      _
    // Predicated region
    $region10: #{tpu_custom_call.1} parent=1 // pred_check
      _
    $region11: #{tpu_custom_call.1} parent=1 // pred_check_branch
      %29 = sbr.rel (0) target = $region13
    $region12: #{tpu_custom_call.1} parent=1 // pred_region
      _
    $region13: #{tpu_custom_call.1} parent=1 // pred_fallthru
      _
    // Predicated region
    $region14: #{tpu_custom_call.1} parent=1 // pred_check
      _
    $region15: #{tpu_custom_call.1} parent=1 // pred_check_branch
      %31 = sbr.rel (0) target = $region17
    $region16: #{tpu_custom_call.1} parent=1 // pred_region
      _
    $region17: #{tpu_custom_call.1} parent=1 // pred_fallthru
      _
    // Predicated region
    $region18: #{tpu_custom_call.1} parent=1 // pred_check
      _
    $region19: #{tpu_custom_call.1} parent=1 // pred_check_branch
      %33 = sbr.rel (0) target = $region21
    $region20: #{tpu_custom_call.1} parent=1 // pred_region
      _
    $region21: #{tpu_custom_call.1} parent=1 // pred_fallthru
      _
    // Predicated region
    $region22: #{tpu_custom_call.1} parent=1 // pred_check
      _
    $region23: #{tpu_custom_call.1} parent=1 // pred_check_branch
      %35 = sbr.rel (0) target = $region25
    $region24: #{tpu_custom_call.1} parent=1 // pred_region
      _
    $region25: #{tpu_custom_call.1} parent=1 // pred_fallthru
      _
    // Predicated region
    $region26: #{tpu_custom_call.1} parent=1 // pred_check
      _
    $region27: #{tpu_custom_call.1} parent=1 // pred_check_branch
      %37 = sbr.rel (0) target = $region29
    $region28: #{tpu_custom_call.1} parent=1 // pred_region
      _
    $region29: #{tpu_custom_call.1} parent=1 // pred_fallthru
      _
    // Predicated region
    $region30: #{tpu_custom_call.1} parent=1 // pred_check
      _
    $region31: #{tpu_custom_call.1} parent=1 // pred_check_branch
      %39 = sbr.rel (0) target = $region33
    $region32: #{tpu_custom_call.1} parent=1 // pred_region
      %40 = dma.done [#allocation3], 16384
    $region33: #{tpu_custom_call.1} parent=1 // pred_fallthru
      _
    %v41 = vld [vmem:[#allocation2] sm:$0xff]
    %v42 = vld [vmem:[#allocation2 + $0x8] sm:$0xff]
    %v43 = vld [vmem:[#allocation2 + $0x10] sm:$0xff]
    %v44 = vld [vmem:[#allocation2 + $0x18] sm:$0xff]
    %v45 = vld [vmem:[#allocation2 + $0x20] sm:$0xff]
    %v46 = vld [vmem:[#allocation2 + $0x28] sm:$0xff]
    %v47 = vld [vmem:[#allocation2 + $0x30] sm:$0xff]
    %v48 = vld [vmem:[#allocation2 + $0x38] sm:$0xff]
    %v49 = vld [vmem:[#allocation2 + $0x40] sm:$0xff]
    %v50 = vld [vmem:[#allocation2 + $0x48] sm:$0xff]
    %v51 = vld [vmem:[#allocation2 + $0x50] sm:$0xff]
    %v52 = vld [vmem:[#allocation2 + $0x58] sm:$0xff]
    %v53 = vld [vmem:[#allocation2 + $0x60] sm:$0xff]
    %v54 = vld [vmem:[#allocation2 + $0x68] sm:$0xff]
    %v55 = vld [vmem:[#allocation2 + $0x70] sm:$0xff]
    %v56 = vld [vmem:[#allocation2 + $0x78] sm:$0xff]
    %v57 = vld [vmem:[#allocation2 + $0x80] sm:$0xff]
    %v58 = vld [vmem:[#allocation2 + $0x88] sm:$0xff]
    %v59 = vld [vmem:[#allocation2 + $0x90] sm:$0xff]
    %v60 = vld [vmem:[#allocation2 + $0x98] sm:$0xff]
    %v61 = vld [vmem:[#allocation2 + $0xa0] sm:$0xff]
    %v62 = vld [vmem:[#allocation2 + $0xa8] sm:$0xff]
    %v63 = vld [vmem:[#allocation2 + $0xb0] sm:$0xff]
    %v64 = vld [vmem:[#allocation2 + $0xb8] sm:$0xff]
    %v65 = vld [vmem:[#allocation2 + $0xc0] sm:$0xff]
    %v66 = vld [vmem:[#allocation2 + $0xc8] sm:$0xff]
    %v67 = vld [vmem:[#allocation2 + $0xd0] sm:$0xff]
    %v68 = vld [vmem:[#allocation2 + $0xd8] sm:$0xff]
    %v69 = vld [vmem:[#allocation2 + $0xe0] sm:$0xff]
    %v70 = vld [vmem:[#allocation2 + $0xe8] sm:$0xff]
    %v71 = vld [vmem:[#allocation2 + $0xf0] sm:$0xff]
    %v72 = vld [vmem:[#allocation2 + $0xf8] sm:$0xff]
    %v73 = vld [vmem:[#allocation2 + $0x100] sm:$0xff]
    %v74 = vld [vmem:[#allocation2 + $0x108] sm:$0xff]
    %v75 = vld [vmem:[#allocation2 + $0x110] sm:$0xff]
    %v76 = vld [vmem:[#allocation2 + $0x118] sm:$0xff]
    %v77 = vld [vmem:[#allocation2 + $0x120] sm:$0xff]
    %v78 = vld [vmem:[#allocation2 + $0x128] sm:$0xff]
    %v79 = vld [vmem:[#allocation2 + $0x130] sm:$0xff]
    %v80 = vld [vmem:[#allocation2 + $0x138] sm:$0xff]
    %v81 = vld [vmem:[#allocation2 + $0x140] sm:$0xff]
    %v82 = vld [vmem:[#allocation2 + $0x148] sm:$0xff]
    %v83 = vld [vmem:[#allocation2 + $0x150] sm:$0xff]
    %v84 = vld [vmem:[#allocation2 + $0x158] sm:$0xff]
    %v85 = vld [vmem:[#allocation2 + $0x160] sm:$0xff]
    %v86 = vld [vmem:[#allocation2 + $0x168] sm:$0xff]
    %v87 = vld [vmem:[#allocation2 + $0x170] sm:$0xff]
    %v88 = vld [vmem:[#allocation2 + $0x178] sm:$0xff]
    %v89 = vld [vmem:[#allocation2 + $0x180] sm:$0xff]
    %v90 = vld [vmem:[#allocation2 + $0x188] sm:$0xff]
    %v91 = vld [vmem:[#allocation2 + $0x190] sm:$0xff]
    %v92 = vld [vmem:[#allocation2 + $0x198] sm:$0xff]
    %v93 = vld [vmem:[#allocation2 + $0x1a0] sm:$0xff]
    %v94 = vld [vmem:[#allocation2 + $0x1a8] sm:$0xff]
    %v95 = vld [vmem:[#allocation2 + $0x1b0] sm:$0xff]
    %v96 = vld [vmem:[#allocation2 + $0x1b8] sm:$0xff]
    %v97 = vld [vmem:[#allocation2 + $0x1c0] sm:$0xff]
    %v98 = vld [vmem:[#allocation2 + $0x1c8] sm:$0xff]
    %v99 = vld [vmem:[#allocation2 + $0x1d0] sm:$0xff]
    %v100 = vld [vmem:[#allocation2 + $0x1d8] sm:$0xff]
    %v101 = vld [vmem:[#allocation2 + $0x1e0] sm:$0xff]
    %v102 = vld [vmem:[#allocation2 + $0x1e8] sm:$0xff]
    %v103 = vld [vmem:[#allocation2 + $0x1f0] sm:$0xff]
    %v104 = vld [vmem:[#allocation2 + $0x1f8] sm:$0xff]
    %v105 = vld [vmem:[#allocation2 + $0x200] sm:$0xff]
    %v106 = vld [vmem:[#allocation2 + $0x208] sm:$0xff]
    %v107 = vld [vmem:[#allocation2 + $0x210] sm:$0xff]
    %v108 = vld [vmem:[#allocation2 + $0x218] sm:$0xff]
    %v109 = vld [vmem:[#allocation2 + $0x220] sm:$0xff]
    %v110 = vld [vmem:[#allocation2 + $0x228] sm:$0xff]
    %v111 = vld [vmem:[#allocation2 + $0x230] sm:$0xff]
    %v112 = vld [vmem:[#allocation2 + $0x238] sm:$0xff]
    %v113 = vld [vmem:[#allocation2 + $0x240] sm:$0xff]
    %v114 = vld [vmem:[#allocation2 + $0x248] sm:$0xff]
    %v115 = vld [vmem:[#allocation2 + $0x250] sm:$0xff]
    %v116 = vld [vmem:[#allocation2 + $0x258] sm:$0xff]
    %v117 = vld [vmem:[#allocation2 + $0x260] sm:$0xff]
    %v118 = vld [vmem:[#allocation2 + $0x268] sm:$0xff]
    %v119 = vld [vmem:[#allocation2 + $0x270] sm:$0xff]
    %v120 = vld [vmem:[#allocation2 + $0x278] sm:$0xff]
    %v121 = vld [vmem:[#allocation2 + $0x280] sm:$0xff]
    %v122 = vld [vmem:[#allocation2 + $0x288] sm:$0xff]
    %v123 = vld [vmem:[#allocation2 + $0x290] sm:$0xff]
    %v124 = vld [vmem:[#allocation2 + $0x298] sm:$0xff]
    %v125 = vld [vmem:[#allocation2 + $0x2a0] sm:$0xff]
    %v126 = vld [vmem:[#allocation2 + $0x2a8] sm:$0xff]
    %v127 = vld [vmem:[#allocation2 + $0x2b0] sm:$0xff]
    %v128 = vld [vmem:[#allocation2 + $0x2b8] sm:$0xff]
    %v129 = vld [vmem:[#allocation2 + $0x2c0] sm:$0xff]
    %v130 = vld [vmem:[#allocation2 + $0x2c8] sm:$0xff]
    %v131 = vld [vmem:[#allocation2 + $0x2d0] sm:$0xff]
    %v132 = vld [vmem:[#allocation2 + $0x2d8] sm:$0xff]
    %v133 = vld [vmem:[#allocation2 + $0x2e0] sm:$0xff]
    %v134 = vld [vmem:[#allocation2 + $0x2e8] sm:$0xff]
    %v135 = vld [vmem:[#allocation2 + $0x2f0] sm:$0xff]
    %v136 = vld [vmem:[#allocation2 + $0x2f8] sm:$0xff]
    %v137 = vld [vmem:[#allocation2 + $0x300] sm:$0xff]
    %v138 = vld [vmem:[#allocation2 + $0x308] sm:$0xff]
    %v139 = vld [vmem:[#allocation2 + $0x310] sm:$0xff]
    %v140 = vld [vmem:[#allocation2 + $0x318] sm:$0xff]
    %v141 = vld [vmem:[#allocation2 + $0x320] sm:$0xff]
    %v142 = vld [vmem:[#allocation2 + $0x328] sm:$0xff]
    %v143 = vld [vmem:[#allocation2 + $0x330] sm:$0xff]
    %v144 = vld [vmem:[#allocation2 + $0x338] sm:$0xff]
    %v145 = vld [vmem:[#allocation2 + $0x340] sm:$0xff]
    %v146 = vld [vmem:[#allocation2 + $0x348] sm:$0xff]
    %v147 = vld [vmem:[#allocation2 + $0x350] sm:$0xff]
    %v148 = vld [vmem:[#allocation2 + $0x358] sm:$0xff]
    %v149 = vld [vmem:[#allocation2 + $0x360] sm:$0xff]
    %v150 = vld [vmem:[#allocation2 + $0x368] sm:$0xff]
    %v151 = vld [vmem:[#allocation2 + $0x370] sm:$0xff]
    %v152 = vld [vmem:[#allocation2 + $0x378] sm:$0xff]
    %v153 = vld [vmem:[#allocation2 + $0x380] sm:$0xff]
    %v154 = vld [vmem:[#allocation2 + $0x388] sm:$0xff]
    %v155 = vld [vmem:[#allocation2 + $0x390] sm:$0xff]
    %v156 = vld [vmem:[#allocation2 + $0x398] sm:$0xff]
    %v157 = vld [vmem:[#allocation2 + $0x3a0] sm:$0xff]
    %v158 = vld [vmem:[#allocation2 + $0x3a8] sm:$0xff]
    %v159 = vld [vmem:[#allocation2 + $0x3b0] sm:$0xff]
    %v160 = vld [vmem:[#allocation2 + $0x3b8] sm:$0xff]
    %v161 = vld [vmem:[#allocation2 + $0x3c0] sm:$0xff]
    %v162 = vld [vmem:[#allocation2 + $0x3c8] sm:$0xff]
    %v163 = vld [vmem:[#allocation2 + $0x3d0] sm:$0xff]
    %v164 = vld [vmem:[#allocation2 + $0x3d8] sm:$0xff]
    %v165 = vld [vmem:[#allocation2 + $0x3e0] sm:$0xff]
    %v166 = vld [vmem:[#allocation2 + $0x3e8] sm:$0xff]
    %v167 = vld [vmem:[#allocation2 + $0x3f0] sm:$0xff]
    %v168 = vld [vmem:[#allocation2 + $0x3f8] sm:$0xff]
    %v169 = vadd.f32 %v41, %v42
    %v170 = vrot.slane %v169, 4
    %v171 = vadd.f32 %v169, %v170
    %v172 = vrot.slane %v171, 2
    %v173 = vadd.f32 %v171, %v172
    %v174 = vrot.slane %v173, 1
    %v175 = vadd.f32 %v173, %v174
    %v176 = vadd.f32 %v43, %v44
    %v177 = vrot.slane %v176, 4
    %v178 = vadd.f32 %v176, %v177
    %v179 = vrot.slane %v178, 2
    %v180 = vadd.f32 %v178, %v179
    %v181 = vrot.slane %v180, 1
    %v182 = vadd.f32 %v180, %v181
    %v183 = vadd.f32 %v45, %v46
    %v184 = vrot.slane %v183, 4
    %v185 = vadd.f32 %v183, %v184
    %v186 = vrot.slane %v185, 2
    %v187 = vadd.f32 %v185, %v186
    %v188 = vrot.slane %v187, 1
    %v189 = vadd.f32 %v187, %v188
    %v190 = vadd.f32 %v47, %v48
    %v191 = vrot.slane %v190, 4
    %v192 = vadd.f32 %v190, %v191
    %v193 = vrot.slane %v192, 2
    %v194 = vadd.f32 %v192, %v193
    %v195 = vrot.slane %v194, 1
    %v196 = vadd.f32 %v194, %v195
    %v197 = vadd.f32 %v49, %v50
    %v198 = vrot.slane %v197, 4
    %v199 = vadd.f32 %v197, %v198
    %v200 = vrot.slane %v199, 2
    %v201 = vadd.f32 %v199, %v200
    %v202 = vrot.slane %v201, 1
    %v203 = vadd.f32 %v201, %v202
    %v204 = vadd.f32 %v51, %v52
    %v205 = vrot.slane %v204, 4
    %v206 = vadd.f32 %v204, %v205
    %v207 = vrot.slane %v206, 2
    %v208 = vadd.f32 %v206, %v207
    %v209 = vrot.slane %v208, 1
    %v210 = vadd.f32 %v208, %v209
    %v211 = vadd.f32 %v53, %v54
    %v212 = vrot.slane %v211, 4
    %v213 = vadd.f32 %v211, %v212
    %v214 = vrot.slane %v213, 2
    %v215 = vadd.f32 %v213, %v214
    %v216 = vrot.slane %v215, 1
    %v217 = vadd.f32 %v215, %v216
    %v218 = vadd.f32 %v55, %v56
    %v219 = vrot.slane %v218, 4
    %v220 = vadd.f32 %v218, %v219
    %v221 = vrot.slane %v220, 2
    %v222 = vadd.f32 %v220, %v221
    %v223 = vrot.slane %v222, 1
    %v224 = vadd.f32 %v222, %v223
    %v225 = vadd.f32 %v57, %v58
    %v226 = vrot.slane %v225, 4
    %v227 = vadd.f32 %v225, %v226
    %v228 = vrot.slane %v227, 2
    %v229 = vadd.f32 %v227, %v228
    %v230 = vrot.slane %v229, 1
    %v231 = vadd.f32 %v229, %v230
    %v232 = vadd.f32 %v59, %v60
    %v233 = vrot.slane %v232, 4
    %v234 = vadd.f32 %v232, %v233
    %v235 = vrot.slane %v234, 2
    %v236 = vadd.f32 %v234, %v235
    %v237 = vrot.slane %v236, 1
    %v238 = vadd.f32 %v236, %v237
    %v239 = vadd.f32 %v61, %v62
    %v240 = vrot.slane %v239, 4
    %v241 = vadd.f32 %v239, %v240
    %v242 = vrot.slane %v241, 2
    %v243 = vadd.f32 %v241, %v242
    %v244 = vrot.slane %v243, 1
    %v245 = vadd.f32 %v243, %v244
    %v246 = vadd.f32 %v63, %v64
    %v247 = vrot.slane %v246, 4
    %v248 = vadd.f32 %v246, %v247
    %v249 = vrot.slane %v248, 2
    %v250 = vadd.f32 %v248, %v249
    %v251 = vrot.slane %v250, 1
    %v252 = vadd.f32 %v250, %v251
    %v253 = vadd.f32 %v65, %v66
    %v254 = vrot.slane %v253, 4
    %v255 = vadd.f32 %v253, %v254
    %v256 = vrot.slane %v255, 2
    %v257 = vadd.f32 %v255, %v256
    %v258 = vrot.slane %v257, 1
    %v259 = vadd.f32 %v257, %v258
    %v260 = vadd.f32 %v67, %v68
    %v261 = vrot.slane %v260, 4
    %v262 = vadd.f32 %v260, %v261
    %v263 = vrot.slane %v262, 2
    %v264 = vadd.f32 %v262, %v263
    %v265 = vrot.slane %v264, 1
    %v266 = vadd.f32 %v264, %v265
    %v267 = vadd.f32 %v69, %v70
    %v268 = vrot.slane %v267, 4
    %v269 = vadd.f32 %v267, %v268
    %v270 = vrot.slane %v269, 2
    %v271 = vadd.f32 %v269, %v270
    %v272 = vrot.slane %v271, 1
    %v273 = vadd.f32 %v271, %v272
    %v274 = vadd.f32 %v71, %v72
    %v275 = vrot.slane %v274, 4
    %v276 = vadd.f32 %v274, %v275
    %v277 = vrot.slane %v276, 2
    %v278 = vadd.f32 %v276, %v277
    %v279 = vrot.slane %v278, 1
    %v280 = vadd.f32 %v278, %v279
    %v281 = vadd.f32 %v73, %v74
    %v282 = vrot.slane %v281, 4
    %v283 = vadd.f32 %v281, %v282
    %v284 = vrot.slane %v283, 2
    %v285 = vadd.f32 %v283, %v284
    %v286 = vrot.slane %v285, 1
    %v287 = vadd.f32 %v285, %v286
    %v288 = vadd.f32 %v75, %v76
    %v289 = vrot.slane %v288, 4
    %v290 = vadd.f32 %v288, %v289
    %v291 = vrot.slane %v290, 2
    %v292 = vadd.f32 %v290, %v291
    %v293 = vrot.slane %v292, 1
    %v294 = vadd.f32 %v292, %v293
    %v295 = vadd.f32 %v77, %v78
    %v296 = vrot.slane %v295, 4
    %v297 = vadd.f32 %v295, %v296
    %v298 = vrot.slane %v297, 2
    %v299 = vadd.f32 %v297, %v298
    %v300 = vrot.slane %v299, 1
    %v301 = vadd.f32 %v299, %v300
    %v302 = vadd.f32 %v79, %v80
    %v303 = vrot.slane %v302, 4
    %v304 = vadd.f32 %v302, %v303
    %v305 = vrot.slane %v304, 2
    %v306 = vadd.f32 %v304, %v305
    %v307 = vrot.slane %v306, 1
    %v308 = vadd.f32 %v306, %v307
    %v309 = vadd.f32 %v81, %v82
    %v310 = vrot.slane %v309, 4
    %v311 = vadd.f32 %v309, %v310
    %v312 = vrot.slane %v311, 2
    %v313 = vadd.f32 %v311, %v312
    %v314 = vrot.slane %v313, 1
    %v315 = vadd.f32 %v313, %v314
    %v316 = vadd.f32 %v83, %v84
    %v317 = vrot.slane %v316, 4
    %v318 = vadd.f32 %v316, %v317
    %v319 = vrot.slane %v318, 2
    %v320 = vadd.f32 %v318, %v319
    %v321 = vrot.slane %v320, 1
    %v322 = vadd.f32 %v320, %v321
    %v323 = vadd.f32 %v85, %v86
    %v324 = vrot.slane %v323, 4
    %v325 = vadd.f32 %v323, %v324
    %v326 = vrot.slane %v325, 2
    %v327 = vadd.f32 %v325, %v326
    %v328 = vrot.slane %v327, 1
    %v329 = vadd.f32 %v327, %v328
    %v330 = vadd.f32 %v87, %v88
    %v331 = vrot.slane %v330, 4
    %v332 = vadd.f32 %v330, %v331
    %v333 = vrot.slane %v332, 2
    %v334 = vadd.f32 %v332, %v333
    %v335 = vrot.slane %v334, 1
    %v336 = vadd.f32 %v334, %v335
    %v337 = vadd.f32 %v89, %v90
    %v338 = vrot.slane %v337, 4
    %v339 = vadd.f32 %v337, %v338
    %v340 = vrot.slane %v339, 2
    %v341 = vadd.f32 %v339, %v340
    %v342 = vrot.slane %v341, 1
    %v343 = vadd.f32 %v341, %v342
    %v344 = vadd.f32 %v91, %v92
    %v345 = vrot.slane %v344, 4
    %v346 = vadd.f32 %v344, %v345
    %v347 = vrot.slane %v346, 2
    %v348 = vadd.f32 %v346, %v347
    %v349 = vrot.slane %v348, 1
    %v350 = vadd.f32 %v348, %v349
    %v351 = vadd.f32 %v93, %v94
    %v352 = vrot.slane %v351, 4
    %v353 = vadd.f32 %v351, %v352
    %v354 = vrot.slane %v353, 2
    %v355 = vadd.f32 %v353, %v354
    %v356 = vrot.slane %v355, 1
    %v357 = vadd.f32 %v355, %v356
    %v358 = vadd.f32 %v95, %v96
    %v359 = vrot.slane %v358, 4
    %v360 = vadd.f32 %v358, %v359
    %v361 = vrot.slane %v360, 2
    %v362 = vadd.f32 %v360, %v361
    %v363 = vrot.slane %v362, 1
    %v364 = vadd.f32 %v362, %v363
    %v365 = vadd.f32 %v97, %v98
    %v366 = vrot.slane %v365, 4
    %v367 = vadd.f32 %v365, %v366
    %v368 = vrot.slane %v367, 2
    %v369 = vadd.f32 %v367, %v368
    %v370 = vrot.slane %v369, 1
    %v371 = vadd.f32 %v369, %v370
    %v372 = vadd.f32 %v99, %v100
    %v373 = vrot.slane %v372, 4
    %v374 = vadd.f32 %v372, %v373
    %v375 = vrot.slane %v374, 2
    %v376 = vadd.f32 %v374, %v375
    %v377 = vrot.slane %v376, 1
    %v378 = vadd.f32 %v376, %v377
    %v379 = vadd.f32 %v101, %v102
    %v380 = vrot.slane %v379, 4
    %v381 = vadd.f32 %v379, %v380
    %v382 = vrot.slane %v381, 2
    %v383 = vadd.f32 %v381, %v382
    %v384 = vrot.slane %v383, 1
    %v385 = vadd.f32 %v383, %v384
    %v386 = vadd.f32 %v103, %v104
    %v387 = vrot.slane %v386, 4
    %v388 = vadd.f32 %v386, %v387
    %v389 = vrot.slane %v388, 2
    %v390 = vadd.f32 %v388, %v389
    %v391 = vrot.slane %v390, 1
    %v392 = vadd.f32 %v390, %v391
    %v393 = vadd.f32 %v105, %v106
    %v394 = vrot.slane %v393, 4
    %v395 = vadd.f32 %v393, %v394
    %v396 = vrot.slane %v395, 2
    %v397 = vadd.f32 %v395, %v396
    %v398 = vrot.slane %v397, 1
    %v399 = vadd.f32 %v397, %v398
    %v400 = vadd.f32 %v107, %v108
    %v401 = vrot.slane %v400, 4
    %v402 = vadd.f32 %v400, %v401
    %v403 = vrot.slane %v402, 2
    %v404 = vadd.f32 %v402, %v403
    %v405 = vrot.slane %v404, 1
    %v406 = vadd.f32 %v404, %v405
    %v407 = vadd.f32 %v109, %v110
    %v408 = vrot.slane %v407, 4
    %v409 = vadd.f32 %v407, %v408
    %v410 = vrot.slane %v409, 2
    %v411 = vadd.f32 %v409, %v410
    %v412 = vrot.slane %v411, 1
    %v413 = vadd.f32 %v411, %v412
    %v414 = vadd.f32 %v111, %v112
    %v415 = vrot.slane %v414, 4
    %v416 = vadd.f32 %v414, %v415
    %v417 = vrot.slane %v416, 2
    %v418 = vadd.f32 %v416, %v417
    %v419 = vrot.slane %v418, 1
    %v420 = vadd.f32 %v418, %v419
    %v421 = vadd.f32 %v113, %v114
    %v422 = vrot.slane %v421, 4
    %v423 = vadd.f32 %v421, %v422
    %v424 = vrot.slane %v423, 2
    %v425 = vadd.f32 %v423, %v424
    %v426 = vrot.slane %v425, 1
    %v427 = vadd.f32 %v425, %v426
    %v428 = vadd.f32 %v115, %v116
    %v429 = vrot.slane %v428, 4
    %v430 = vadd.f32 %v428, %v429
    %v431 = vrot.slane %v430, 2
    %v432 = vadd.f32 %v430, %v431
    %v433 = vrot.slane %v432, 1
    %v434 = vadd.f32 %v432, %v433
    %v435 = vadd.f32 %v117, %v118
    %v436 = vrot.slane %v435, 4
    %v437 = vadd.f32 %v435, %v436
    %v438 = vrot.slane %v437, 2
    %v439 = vadd.f32 %v437, %v438
    %v440 = vrot.slane %v439, 1
    %v441 = vadd.f32 %v439, %v440
    %v442 = vadd.f32 %v119, %v120
    %v443 = vrot.slane %v442, 4
    %v444 = vadd.f32 %v442, %v443
    %v445 = vrot.slane %v444, 2
    %v446 = vadd.f32 %v444, %v445
    %v447 = vrot.slane %v446, 1
    %v448 = vadd.f32 %v446, %v447
    %v449 = vadd.f32 %v121, %v122
    %v450 = vrot.slane %v449, 4
    %v451 = vadd.f32 %v449, %v450
    %v452 = vrot.slane %v451, 2
    %v453 = vadd.f32 %v451, %v452
    %v454 = vrot.slane %v453, 1
    %v455 = vadd.f32 %v453, %v454
    %v456 = vadd.f32 %v123, %v124
    %v457 = vrot.slane %v456, 4
    %v458 = vadd.f32 %v456, %v457
    %v459 = vrot.slane %v458, 2
    %v460 = vadd.f32 %v458, %v459
    %v461 = vrot.slane %v460, 1
    %v462 = vadd.f32 %v460, %v461
    %v463 = vadd.f32 %v125, %v126
    %v464 = vrot.slane %v463, 4
    %v465 = vadd.f32 %v463, %v464
    %v466 = vrot.slane %v465, 2
    %v467 = vadd.f32 %v465, %v466
    %v468 = vrot.slane %v467, 1
    %v469 = vadd.f32 %v467, %v468
    %v470 = vadd.f32 %v127, %v128
    %v471 = vrot.slane %v470, 4
    %v472 = vadd.f32 %v470, %v471
    %v473 = vrot.slane %v472, 2
    %v474 = vadd.f32 %v472, %v473
    %v475 = vrot.slane %v474, 1
    %v476 = vadd.f32 %v474, %v475
    %v477 = vadd.f32 %v129, %v130
    %v478 = vrot.slane %v477, 4
    %v479 = vadd.f32 %v477, %v478
    %v480 = vrot.slane %v479, 2
    %v481 = vadd.f32 %v479, %v480
    %v482 = vrot.slane %v481, 1
    %v483 = vadd.f32 %v481, %v482
    %v484 = vadd.f32 %v131, %v132
    %v485 = vrot.slane %v484, 4
    %v486 = vadd.f32 %v484, %v485
    %v487 = vrot.slane %v486, 2
    %v488 = vadd.f32 %v486, %v487
    %v489 = vrot.slane %v488, 1
    %v490 = vadd.f32 %v488, %v489
    %v491 = vadd.f32 %v133, %v134
    %v492 = vrot.slane %v491, 4
    %v493 = vadd.f32 %v491, %v492
    %v494 = vrot.slane %v493, 2
    %v495 = vadd.f32 %v493, %v494
    %v496 = vrot.slane %v495, 1
    %v497 = vadd.f32 %v495, %v496
    %v498 = vadd.f32 %v135, %v136
    %v499 = vrot.slane %v498, 4
    %v500 = vadd.f32 %v498, %v499
    %v501 = vrot.slane %v500, 2
    %v502 = vadd.f32 %v500, %v501
    %v503 = vrot.slane %v502, 1
    %v504 = vadd.f32 %v502, %v503
    %v505 = vadd.f32 %v137, %v138
    %v506 = vrot.slane %v505, 4
    %v507 = vadd.f32 %v505, %v506
    %v508 = vrot.slane %v507, 2
    %v509 = vadd.f32 %v507, %v508
    %v510 = vrot.slane %v509, 1
    %v511 = vadd.f32 %v509, %v510
    %v512 = vadd.f32 %v139, %v140
    %v513 = vrot.slane %v512, 4
    %v514 = vadd.f32 %v512, %v513
    %v515 = vrot.slane %v514, 2
    %v516 = vadd.f32 %v514, %v515
    %v517 = vrot.slane %v516, 1
    %v518 = vadd.f32 %v516, %v517
    %v519 = vadd.f32 %v141, %v142
    %v520 = vrot.slane %v519, 4
    %v521 = vadd.f32 %v519, %v520
    %v522 = vrot.slane %v521, 2
    %v523 = vadd.f32 %v521, %v522
    %v524 = vrot.slane %v523, 1
    %v525 = vadd.f32 %v523, %v524
    %v526 = vadd.f32 %v143, %v144
    %v527 = vrot.slane %v526, 4
    %v528 = vadd.f32 %v526, %v527
    %v529 = vrot.slane %v528, 2
    %v530 = vadd.f32 %v528, %v529
    %v531 = vrot.slane %v530, 1
    %v532 = vadd.f32 %v530, %v531
    %v533 = vadd.f32 %v145, %v146
    %v534 = vrot.slane %v533, 4
    %v535 = vadd.f32 %v533, %v534
    %v536 = vrot.slane %v535, 2
    %v537 = vadd.f32 %v535, %v536
    %v538 = vrot.slane %v537, 1
    %v539 = vadd.f32 %v537, %v538
    %v540 = vadd.f32 %v147, %v148
    %v541 = vrot.slane %v540, 4
    %v542 = vadd.f32 %v540, %v541
    %v543 = vrot.slane %v542, 2
    %v544 = vadd.f32 %v542, %v543
    %v545 = vrot.slane %v544, 1
    %v546 = vadd.f32 %v544, %v545
    %v547 = vadd.f32 %v149, %v150
    %v548 = vrot.slane %v547, 4
    %v549 = vadd.f32 %v547, %v548
    %v550 = vrot.slane %v549, 2
    %v551 = vadd.f32 %v549, %v550
    %v552 = vrot.slane %v551, 1
    %v553 = vadd.f32 %v551, %v552
    %v554 = vadd.f32 %v151, %v152
    %v555 = vrot.slane %v554, 4
    %v556 = vadd.f32 %v554, %v555
    %v557 = vrot.slane %v556, 2
    %v558 = vadd.f32 %v556, %v557
    %v559 = vrot.slane %v558, 1
    %v560 = vadd.f32 %v558, %v559
    %v561 = vadd.f32 %v153, %v154
    %v562 = vrot.slane %v561, 4
    %v563 = vadd.f32 %v561, %v562
    %v564 = vrot.slane %v563, 2
    %v565 = vadd.f32 %v563, %v564
    %v566 = vrot.slane %v565, 1
    %v567 = vadd.f32 %v565, %v566
    %v568 = vadd.f32 %v155, %v156
    %v569 = vrot.slane %v568, 4
    %v570 = vadd.f32 %v568, %v569
    %v571 = vrot.slane %v570, 2
    %v572 = vadd.f32 %v570, %v571
    %v573 = vrot.slane %v572, 1
    %v574 = vadd.f32 %v572, %v573
    %v575 = vadd.f32 %v157, %v158
    %v576 = vrot.slane %v575, 4
    %v577 = vadd.f32 %v575, %v576
    %v578 = vrot.slane %v577, 2
    %v579 = vadd.f32 %v577, %v578
    %v580 = vrot.slane %v579, 1
    %v581 = vadd.f32 %v579, %v580
    %v582 = vadd.f32 %v159, %v160
    %v583 = vrot.slane %v582, 4
    %v584 = vadd.f32 %v582, %v583
    %v585 = vrot.slane %v584, 2
    %v586 = vadd.f32 %v584, %v585
    %v587 = vrot.slane %v586, 1
    %v588 = vadd.f32 %v586, %v587
    %v589 = vadd.f32 %v161, %v162
    %v590 = vrot.slane %v589, 4
    %v591 = vadd.f32 %v589, %v590
    %v592 = vrot.slane %v591, 2
    %v593 = vadd.f32 %v591, %v592
    %v594 = vrot.slane %v593, 1
    %v595 = vadd.f32 %v593, %v594
    %v596 = vadd.f32 %v163, %v164
    %v597 = vrot.slane %v596, 4
    %v598 = vadd.f32 %v596, %v597
    %v599 = vrot.slane %v598, 2
    %v600 = vadd.f32 %v598, %v599
    %v601 = vrot.slane %v600, 1
    %v602 = vadd.f32 %v600, %v601
    %v603 = vadd.f32 %v165, %v166
    %v604 = vrot.slane %v603, 4
    %v605 = vadd.f32 %v603, %v604
    %v606 = vrot.slane %v605, 2
    %v607 = vadd.f32 %v605, %v606
    %v608 = vrot.slane %v607, 1
    %v609 = vadd.f32 %v607, %v608
    %v610 = vadd.f32 %v167, %v168
    %v611 = vrot.slane %v610, 4
    %v612 = vadd.f32 %v610, %v611
    %v613 = vrot.slane %v612, 2
    %v614 = vadd.f32 %v612, %v613
    %v615 = vrot.slane %v614, 1
    %v616 = vadd.f32 %v614, %v615
    %v617 = vrcp.pop 16.0
    %v618 = vmul.f32 %v175, %v617
    %v619 = vmul.f32 %v182, %v617
    %v620 = vmul.f32 %v189, %v617
    %v621 = vmul.f32 %v196, %v617
    %v622 = vmul.f32 %v203, %v617
    %v623 = vmul.f32 %v210, %v617
    %v624 = vmul.f32 %v217, %v617
    %v625 = vmul.f32 %v224, %v617
    %v626 = vmul.f32 %v231, %v617
    %v627 = vmul.f32 %v238, %v617
    %v628 = vmul.f32 %v245, %v617
    %v629 = vmul.f32 %v252, %v617
    %v630 = vmul.f32 %v259, %v617
    %v631 = vmul.f32 %v266, %v617
    %v632 = vmul.f32 %v273, %v617
    %v633 = vmul.f32 %v280, %v617
    %v634 = vmul.f32 %v287, %v617
    %v635 = vmul.f32 %v294, %v617
    %v636 = vmul.f32 %v301, %v617
    %v637 = vmul.f32 %v308, %v617
    %v638 = vmul.f32 %v315, %v617
    %v639 = vmul.f32 %v322, %v617
    %v640 = vmul.f32 %v329, %v617
    %v641 = vmul.f32 %v336, %v617
    %v642 = vmul.f32 %v343, %v617
    %v643 = vmul.f32 %v350, %v617
    %v644 = vmul.f32 %v357, %v617
    %v645 = vmul.f32 %v364, %v617
    %v646 = vmul.f32 %v371, %v617
    %v647 = vmul.f32 %v378, %v617
    %v648 = vmul.f32 %v385, %v617
    %v649 = vmul.f32 %v392, %v617
    %v650 = vmul.f32 %v399, %v617
    %v651 = vmul.f32 %v406, %v617
    %v652 = vmul.f32 %v413, %v617
    %v653 = vmul.f32 %v420, %v617
    %v654 = vmul.f32 %v427, %v617
    %v655 = vmul.f32 %v434, %v617
    %v656 = vmul.f32 %v441, %v617
    %v657 = vmul.f32 %v448, %v617
    %v658 = vmul.f32 %v455, %v617
    %v659 = vmul.f32 %v462, %v617
    %v660 = vmul.f32 %v469, %v617
    %v661 = vmul.f32 %v476, %v617
    %v662 = vmul.f32 %v483, %v617
    %v663 = vmul.f32 %v490, %v617
    %v664 = vmul.f32 %v497, %v617
    %v665 = vmul.f32 %v504, %v617
    %v666 = vmul.f32 %v511, %v617
    %v667 = vmul.f32 %v518, %v617
    %v668 = vmul.f32 %v525, %v617
    %v669 = vmul.f32 %v532, %v617
    %v670 = vmul.f32 %v539, %v617
    %v671 = vmul.f32 %v546, %v617
    %v672 = vmul.f32 %v553, %v617
    %v673 = vmul.f32 %v560, %v617
    %v674 = vmul.f32 %v567, %v617
    %v675 = vmul.f32 %v574, %v617
    %v676 = vmul.f32 %v581, %v617
    %v677 = vmul.f32 %v588, %v617
    %v678 = vmul.f32 %v595, %v617
    %v679 = vmul.f32 %v602, %v617
    %v680 = vmul.f32 %v609, %v617
    %v681 = vmul.f32 %v616, %v617
    %v682 = vadd.f32 %v41, %v43
    %v683 = vadd.f32 %v682, %v45
    %v684 = vadd.f32 %v683, %v47
    %v685 = vadd.f32 %v684, %v49
    %v686 = vadd.f32 %v685, %v51
    %v687 = vadd.f32 %v686, %v53
    %v688 = vadd.f32 %v687, %v55
    %v689 = vadd.f32 %v688, %v57
    %v690 = vadd.f32 %v689, %v59
    %v691 = vadd.f32 %v690, %v61
    %v692 = vadd.f32 %v691, %v63
    %v693 = vadd.f32 %v692, %v65
    %v694 = vadd.f32 %v693, %v67
    %v695 = vadd.f32 %v694, %v69
    %v696 = vadd.f32 %v695, %v71
    %v697 = vadd.f32 %v42, %v44
    %v698 = vadd.f32 %v697, %v46
    %v699 = vadd.f32 %v698, %v48
    %v700 = vadd.f32 %v699, %v50
    %v701 = vadd.f32 %v700, %v52
    %v702 = vadd.f32 %v701, %v54
    %v703 = vadd.f32 %v702, %v56
    %v704 = vadd.f32 %v703, %v58
    %v705 = vadd.f32 %v704, %v60
    %v706 = vadd.f32 %v705, %v62
    %v707 = vadd.f32 %v706, %v64
    %v708 = vadd.f32 %v707, %v66
    %v709 = vadd.f32 %v708, %v68
    %v710 = vadd.f32 %v709, %v70
    %v711 = vadd.f32 %v710, %v72
    %v712 = vadd.f32 %v73, %v75
    %v713 = vadd.f32 %v712, %v77
    %v714 = vadd.f32 %v713, %v79
    %v715 = vadd.f32 %v714, %v81
    %v716 = vadd.f32 %v715, %v83
    %v717 = vadd.f32 %v716, %v85
    %v718 = vadd.f32 %v717, %v87
    %v719 = vadd.f32 %v718, %v89
    %v720 = vadd.f32 %v719, %v91
    %v721 = vadd.f32 %v720, %v93
    %v722 = vadd.f32 %v721, %v95
    %v723 = vadd.f32 %v722, %v97
    %v724 = vadd.f32 %v723, %v99
    %v725 = vadd.f32 %v724, %v101
    %v726 = vadd.f32 %v725, %v103
    %v727 = vadd.f32 %v74, %v76
    %v728 = vadd.f32 %v727, %v78
    %v729 = vadd.f32 %v728, %v80
    %v730 = vadd.f32 %v729, %v82
    %v731 = vadd.f32 %v730, %v84
    %v732 = vadd.f32 %v731, %v86
    %v733 = vadd.f32 %v732, %v88
    %v734 = vadd.f32 %v733, %v90
    %v735 = vadd.f32 %v734, %v92
    %v736 = vadd.f32 %v735, %v94
    %v737 = vadd.f32 %v736, %v96
    %v738 = vadd.f32 %v737, %v98
    %v739 = vadd.f32 %v738, %v100
    %v740 = vadd.f32 %v739, %v102
    %v741 = vadd.f32 %v740, %v104
    %v742 = vadd.f32 %v105, %v107
    %v743 = vadd.f32 %v742, %v109
    %v744 = vadd.f32 %v743, %v111
    %v745 = vadd.f32 %v744, %v113
    %v746 = vadd.f32 %v745, %v115
    %v747 = vadd.f32 %v746, %v117
    %v748 = vadd.f32 %v747, %v119
    %v749 = vadd.f32 %v748, %v121
    %v750 = vadd.f32 %v749, %v123
    %v751 = vadd.f32 %v750, %v125
    %v752 = vadd.f32 %v751, %v127
    %v753 = vadd.f32 %v752, %v129
    %v754 = vadd.f32 %v753, %v131
    %v755 = vadd.f32 %v754, %v133
    %v756 = vadd.f32 %v755, %v135
    %v757 = vadd.f32 %v106, %v108
    %v758 = vadd.f32 %v757, %v110
    %v759 = vadd.f32 %v758, %v112
    %v760 = vadd.f32 %v759, %v114
    %v761 = vadd.f32 %v760, %v116
    %v762 = vadd.f32 %v761, %v118
    %v763 = vadd.f32 %v762, %v120
    %v764 = vadd.f32 %v763, %v122
    %v765 = vadd.f32 %v764, %v124
    %v766 = vadd.f32 %v765, %v126
    %v767 = vadd.f32 %v766, %v128
    %v768 = vadd.f32 %v767, %v130
    %v769 = vadd.f32 %v768, %v132
    %v770 = vadd.f32 %v769, %v134
    %v771 = vadd.f32 %v770, %v136
    %v772 = vadd.f32 %v137, %v139
    %v773 = vadd.f32 %v772, %v141
    %v774 = vadd.f32 %v773, %v143
    %v775 = vadd.f32 %v774, %v145
    %v776 = vadd.f32 %v775, %v147
    %v777 = vadd.f32 %v776, %v149
    %v778 = vadd.f32 %v777, %v151
    %v779 = vadd.f32 %v778, %v153
    %v780 = vadd.f32 %v779, %v155
    %v781 = vadd.f32 %v780, %v157
    %v782 = vadd.f32 %v781, %v159
    %v783 = vadd.f32 %v782, %v161
    %v784 = vadd.f32 %v783, %v163
    %v785 = vadd.f32 %v784, %v165
    %v786 = vadd.f32 %v785, %v167
    %v787 = vadd.f32 %v138, %v140
    %v788 = vadd.f32 %v787, %v142
    %v789 = vadd.f32 %v788, %v144
    %v790 = vadd.f32 %v789, %v146
    %v791 = vadd.f32 %v790, %v148
    %v792 = vadd.f32 %v791, %v150
    %v793 = vadd.f32 %v792, %v152
    %v794 = vadd.f32 %v793, %v154
    %v795 = vadd.f32 %v794, %v156
    %v796 = vadd.f32 %v795, %v158
    %v797 = vadd.f32 %v796, %v160
    %v798 = vadd.f32 %v797, %v162
    %v799 = vadd.f32 %v798, %v164
    %v800 = vadd.f32 %v799, %v166
    %v801 = vadd.f32 %v800, %v168
    %v802 = vmul.f32 %v696, %v617
    %v803 = vmul.f32 %v711, %v617
    %v804 = vmul.f32 %v726, %v617
    %v805 = vmul.f32 %v741, %v617
    %v806 = vmul.f32 %v756, %v617
    %v807 = vmul.f32 %v771, %v617
    %v808 = vmul.f32 %v786, %v617
    %v809 = vmul.f32 %v801, %v617
    %vm874 = vcmask 1041409
    %v875 = vsel %vm874, %v619, %v618
    %vm876 = vcmask 1042434
    %v877 = vsel %vm876, %v620, %v875
    %vm878 = vcmask 1043459
    %v879 = vsel %vm878, %v621, %v877
    %vm880 = vcmask 1044484
    %v881 = vsel %vm880, %v622, %v879
    %vm882 = vcmask 1045509
    %v883 = vsel %vm882, %v623, %v881
    %vm884 = vcmask 1046534
    %v885 = vsel %vm884, %v624, %v883
    %vm886 = vcmask 1047559
    %v887 = vsel %vm886, %v625, %v885
    %v888 = vsel %vm874, %v627, %v626
    %v889 = vsel %vm876, %v628, %v888
    %v890 = vsel %vm878, %v629, %v889
    %v891 = vsel %vm880, %v630, %v890
    %v892 = vsel %vm882, %v631, %v891
    %v893 = vsel %vm884, %v632, %v892
    %v894 = vsel %vm886, %v633, %v893
    %v895 = vsel %vm874, %v635, %v634
    %v896 = vsel %vm876, %v636, %v895
    %v897 = vsel %vm878, %v637, %v896
    %v898 = vsel %vm880, %v638, %v897
    %v899 = vsel %vm882, %v639, %v898
    %v900 = vsel %vm884, %v640, %v899
    %v901 = vsel %vm886, %v641, %v900
    %v902 = vsel %vm874, %v643, %v642
    %v903 = vsel %vm876, %v644, %v902
    %v904 = vsel %vm878, %v645, %v903
    %v905 = vsel %vm880, %v646, %v904
    %v906 = vsel %vm882, %v647, %v905
    %v907 = vsel %vm884, %v648, %v906
    %v908 = vsel %vm886, %v649, %v907
    %v909 = vsel %vm874, %v651, %v650
    %v910 = vsel %vm876, %v652, %v909
    %v911 = vsel %vm878, %v653, %v910
    %v912 = vsel %vm880, %v654, %v911
    %v913 = vsel %vm882, %v655, %v912
    %v914 = vsel %vm884, %v656, %v913
    %v915 = vsel %vm886, %v657, %v914
    %v916 = vsel %vm874, %v659, %v658
    %v917 = vsel %vm876, %v660, %v916
    %v918 = vsel %vm878, %v661, %v917
    %v919 = vsel %vm880, %v662, %v918
    %v920 = vsel %vm882, %v663, %v919
    %v921 = vsel %vm884, %v664, %v920
    %v922 = vsel %vm886, %v665, %v921
    %v923 = vsel %vm874, %v667, %v666
    %v924 = vsel %vm876, %v668, %v923
    %v925 = vsel %vm878, %v669, %v924
    %v926 = vsel %vm880, %v670, %v925
    %v927 = vsel %vm882, %v671, %v926
    %v928 = vsel %vm884, %v672, %v927
    %v929 = vsel %vm886, %v673, %v928
    %v930 = vsel %vm874, %v675, %v674
    %v931 = vsel %vm876, %v676, %v930
    %v932 = vsel %vm878, %v677, %v931
    %v933 = vsel %vm880, %v678, %v932
    %v934 = vsel %vm882, %v679, %v933
    %v935 = vsel %vm884, %v680, %v934
    %v936 = vsel %vm886, %v681, %v935
    %v945 = vld [vmem:[%s1] sm:$0xff]
    %v946 = vld [vmem:[%s1 + $0x8] sm:$0xff]
    %v947 = vld [vmem:[%s1 + $0x10] sm:$0xff]
    %v948 = vld [vmem:[%s1 + $0x18] sm:$0xff]
    %v949 = vld [vmem:[%s1 + $0x20] sm:$0xff]
    %v950 = vld [vmem:[%s1 + $0x28] sm:$0xff]
    %v951 = vld [vmem:[%s1 + $0x30] sm:$0xff]
    %v952 = vld [vmem:[%s1 + $0x38] sm:$0xff]
    %v953 = vld [vmem:[%s1 + $0x40] sm:$0xff]
    %v954 = vld [vmem:[%s1 + $0x48] sm:$0xff]
    %v955 = vld [vmem:[%s1 + $0x50] sm:$0xff]
    %v956 = vld [vmem:[%s1 + $0x58] sm:$0xff]
    %v957 = vld [vmem:[%s1 + $0x60] sm:$0xff]
    %v958 = vld [vmem:[%s1 + $0x68] sm:$0xff]
    %v959 = vld [vmem:[%s1 + $0x70] sm:$0xff]
    %v960 = vld [vmem:[%s1 + $0x78] sm:$0xff]
    %v961 = vld [vmem:[%s2] sm:$0x1]
    %v963 = vlaneseq
    %v964 = vshrl.u32 %v963, 7
    %v965 = vsub.s32 0, %v964
    %v966 = vrot.slane %v961, %v965
    %968 = vmatprep.subr.mxu0 0.0
    %969 = vmatpush1.msra.mxu0 %v945
    %970 = vmatprep.subr.mxu0 0.0
    %971 = vmatpush1.msra.mxu0 %v946
    %972 = vmatprep.subr.mxu0 0.0
    %973 = vmatpush1.msra.mxu0 %v947
    %974 = vmatprep.subr.mxu0 0.0
    %975 = vmatpush1.msra.mxu0 %v948
    %976 = vmatprep.subr.mxu0 0.0
    %977 = vmatpush1.msra.mxu0 %v949
    %978 = vmatprep.subr.mxu0 0.0
    %979 = vmatpush1.msra.mxu0 %v950
    %980 = vmatprep.subr.mxu0 0.0
    %981 = vmatpush1.msra.mxu0 %v951
    %982 = vmatprep.subr.mxu0 0.0
    %983 = vmatpush1.msra.mxu0 %v952
    %984 = vmatprep.subr.mxu0 0.0
    %985 = vmatpush1.msra.mxu0 %v953
    %986 = vmatprep.subr.mxu0 0.0
    %987 = vmatpush1.msra.mxu0 %v954
    %988 = vmatprep.subr.mxu0 0.0
    %989 = vmatpush1.msra.mxu0 %v955
    %990 = vmatprep.subr.mxu0 0.0
    %991 = vmatpush1.msra.mxu0 %v956
    %992 = vmatprep.subr.mxu0 0.0
    %993 = vmatpush1.msra.mxu0 %v957
    %994 = vmatprep.subr.mxu0 0.0
    %995 = vmatpush1.msra.mxu0 %v958
    %996 = vmatprep.subr.mxu0 0.0
    %997 = vmatpush1.msra.mxu0 %v959
    %998 = vmatprep.subr.mxu0 0.0
    %999 = vmatpush1.msra.mxu0 %v960
    %1000 = vmatprep.subr.mxu0 0.0
    %1001 = vmatpush1.msra.mxu0 0.0
    %1002 = vmatprep.subr.mxu0 0.0
    %1003 = vmatpush1.msra.mxu0 0.0
    %1004 = vmatprep.subr.mxu0 0.0
    %1005 = vmatpush1.msra.mxu0 0.0
    %1006 = vmatprep.subr.mxu0 0.0
    %1007 = vmatpush1.msra.mxu0 0.0
    %1008 = vmatprep.subr.mxu0 0.0
    %1009 = vmatpush1.msra.mxu0 0.0
    %1010 = vmatprep.subr.mxu0 0.0
    %1011 = vmatpush1.msra.mxu0 0.0
    %1012 = vmatprep.subr.mxu0 0.0
    %1013 = vmatpush1.msra.mxu0 0.0
    %1014 = vmatprep.subr.mxu0 0.0
    %1015 = vmatpush1.msra.mxu0 0.0
    %1016 = vmatprep.subr.mxu0 0.0
    %1017 = vmatpush1.msra.mxu0 0.0
    %1018 = vmatprep.subr.mxu0 0.0
    %1019 = vmatpush1.msra.mxu0 0.0
    %1020 = vmatprep.subr.mxu0 0.0
    %1021 = vmatpush1.msra.mxu0 0.0
    %1022 = vmatprep.subr.mxu0 0.0
    %1023 = vmatpush1.msra.mxu0 0.0
    %1024 = vmatprep.subr.mxu0 0.0
    %1025 = vmatpush1.msra.mxu0 0.0
    %1026 = vmatprep.subr.mxu0 0.0
    %1027 = vmatpush1.msra.mxu0 0.0
    %1028 = vmatprep.subr.mxu0 0.0
    %1029 = vmatpush1.msra.mxu0 0.0
    %1030 = vmatprep.subr.mxu0 0.0
    %1031 = vmatpush1.msra.mxu0 0.0
    %1032 = vmatprep.mubr.f32.mxu0 0.0
    %1033 = vmatmul.mubr.f32.gmra.mrb[0].mxu0 %v887
    %v1034 = vpop.f32.mrb[0].mxu0
    %v1035 = vadd.f32 %v966, %v1034
    %v1036 = vpop.f32.mrb[0].mxu0
    %1037 = vmatprep.mubr.f32.mxu0 0.0
    %1038 = vmatmul.mubr.f32.gmra.mrb[0].mxu0 %v894
    %v1039 = vpop.f32.mrb[0].mxu0
    %v1040 = vadd.f32 %v966, %v1039
    %v1041 = vpop.f32.mrb[0].mxu0
    %1042 = vmatprep.mubr.f32.mxu0 0.0
    %1043 = vmatmul.mubr.f32.gmra.mrb[0].mxu0 %v802
    %v1044 = vpop.f32.mrb[0].mxu0
    %v1045 = vadd.f32 %v966, %v1044
    %v1046 = vpop.f32.mrb[0].mxu0
    %1047 = vmatprep.mubr.f32.mxu0 0.0
    %1048 = vmatmul.mubr.f32.gmra.mrb[0].mxu0 %v803
    %v1049 = vpop.f32.mrb[0].mxu0
    %v1050 = vadd.f32 %v966, %v1049
    %v1051 = vpop.f32.mrb[0].mxu0
    %1052 = vmatprep.mubr.f32.mxu0 0.0
    %1053 = vmatmul.mubr.f32.gmra.mrb[0].mxu0 %v901
    %v1054 = vpop.f32.mrb[0].mxu0
    %v1055 = vadd.f32 %v966, %v1054
    %v1056 = vpop.f32.mrb[0].mxu0
    %1057 = vmatprep.mubr.f32.mxu0 0.0
    %1058 = vmatmul.mubr.f32.gmra.mrb[0].mxu0 %v908
    %v1059 = vpop.f32.mrb[0].mxu0
    %v1060 = vadd.f32 %v966, %v1059
    %v1061 = vpop.f32.mrb[0].mxu0
    %1062 = vmatprep.mubr.f32.mxu0 0.0
    %1063 = vmatmul.mubr.f32.gmra.mrb[0].mxu0 %v804
    %v1064 = vpop.f32.mrb[0].mxu0
    %v1065 = vadd.f32 %v966, %v1064
    %v1066 = vpop.f32.mrb[0].mxu0
    %1067 = vmatprep.mubr.f32.mxu0 0.0
    %1068 = vmatmul.mubr.f32.gmra.mrb[0].mxu0 %v805
    %v1069 = vpop.f32.mrb[0].mxu0
    %v1070 = vadd.f32 %v966, %v1069
    %v1071 = vpop.f32.mrb[0].mxu0
    %1072 = vmatprep.mubr.f32.mxu0 0.0
    %1073 = vmatmul.mubr.f32.gmra.mrb[0].mxu0 %v915
    %v1074 = vpop.f32.mrb[0].mxu0
    %v1075 = vadd.f32 %v966, %v1074
    %v1076 = vpop.f32.mrb[0].mxu0
    %1077 = vmatprep.mubr.f32.mxu0 0.0
    %1078 = vmatmul.mubr.f32.gmra.mrb[0].mxu0 %v922
    %v1079 = vpop.f32.mrb[0].mxu0
    %v1080 = vadd.f32 %v966, %v1079
    %v1081 = vpop.f32.mrb[0].mxu0
    %1082 = vmatprep.mubr.f32.mxu0 0.0
    %1083 = vmatmul.mubr.f32.gmra.mrb[0].mxu0 %v806
    %v1084 = vpop.f32.mrb[0].mxu0
    %v1085 = vadd.f32 %v966, %v1084
    %v1086 = vpop.f32.mrb[0].mxu0
    %1087 = vmatprep.mubr.f32.mxu0 0.0
    %1088 = vmatmul.mubr.f32.gmra.mrb[0].mxu0 %v807
    %v1089 = vpop.f32.mrb[0].mxu0
    %v1090 = vadd.f32 %v966, %v1089
    %v1091 = vpop.f32.mrb[0].mxu0
    %1092 = vmatprep.mubr.f32.mxu0 0.0
    %1093 = vmatmul.mubr.f32.gmra.mrb[0].mxu0 %v929
    %v1094 = vpop.f32.mrb[0].mxu0
    %v1095 = vadd.f32 %v966, %v1094
    %v1096 = vpop.f32.mrb[0].mxu0
    %1097 = vmatprep.mubr.f32.mxu0 0.0
    %1098 = vmatmul.mubr.f32.gmra.mrb[0].mxu0 %v936
    %v1099 = vpop.f32.mrb[0].mxu0
    %v1100 = vadd.f32 %v966, %v1099
    %v1101 = vpop.f32.mrb[0].mxu0
    %1102 = vmatprep.mubr.f32.mxu0 0.0
    %1103 = vmatmul.mubr.f32.gmra.mrb[0].mxu0 %v808
    %v1104 = vpop.f32.mrb[0].mxu0
    %v1105 = vadd.f32 %v966, %v1104
    %v1106 = vpop.f32.mrb[0].mxu0
    %1107 = vmatprep.mubr.f32.mxu0 0.0
    %1108 = vmatmul.mubr.f32.gmra.mrb[0].mxu0 %v809
    %v1109 = vpop.f32.mrb[0].mxu0
    %v1110 = vadd.f32 %v966, %v1109
    %v1111 = vpop.f32.mrb[0].mxu0
    %1112 = vdwg.mxu0
    %v1113 = vadd.f32 %v1035, 3.0
    %v1114 = vadd.f32 %v1040, 3.0
    %v1115 = vadd.f32 %v1045, 3.0
    %v1116 = vadd.f32 %v1050, 3.0
    %v1117 = vadd.f32 %v1055, 3.0
    %v1118 = vadd.f32 %v1060, 3.0
    %v1119 = vadd.f32 %v1065, 3.0
    %v1120 = vadd.f32 %v1070, 3.0
    %v1121 = vadd.f32 %v1075, 3.0
    %v1122 = vadd.f32 %v1080, 3.0
    %v1123 = vadd.f32 %v1085, 3.0
    %v1124 = vadd.f32 %v1090, 3.0
    %v1125 = vadd.f32 %v1095, 3.0
    %v1126 = vadd.f32 %v1100, 3.0
    %v1127 = vadd.f32 %v1105, 3.0
    %v1128 = vadd.f32 %v1110, 3.0
    %v1129 = vmax.f32 %v1113, 0.0
    %v1130 = vmax.f32 %v1114, 0.0
    %v1131 = vmax.f32 %v1115, 0.0
    %v1132 = vmax.f32 %v1116, 0.0
    %v1133 = vmax.f32 %v1117, 0.0
    %v1134 = vmax.f32 %v1118, 0.0
    %v1135 = vmax.f32 %v1119, 0.0
    %v1136 = vmax.f32 %v1120, 0.0
    %v1137 = vmax.f32 %v1121, 0.0
    %v1138 = vmax.f32 %v1122, 0.0
    %v1139 = vmax.f32 %v1123, 0.0
    %v1140 = vmax.f32 %v1124, 0.0
    %v1141 = vmax.f32 %v1125, 0.0
    %v1142 = vmax.f32 %v1126, 0.0
    %v1143 = vmax.f32 %v1127, 0.0
    %v1144 = vmax.f32 %v1128, 0.0
    %v1145 = vmin.f32 %v1129, 6.0
    %v1146 = vmin.f32 %v1130, 6.0
    %v1147 = vmin.f32 %v1131, 6.0
    %v1148 = vmin.f32 %v1132, 6.0
    %v1149 = vmin.f32 %v1133, 6.0
    %v1150 = vmin.f32 %v1134, 6.0
    %v1151 = vmin.f32 %v1135, 6.0
    %v1152 = vmin.f32 %v1136, 6.0
    %v1153 = vmin.f32 %v1137, 6.0
    %v1154 = vmin.f32 %v1138, 6.0
    %v1155 = vmin.f32 %v1139, 6.0
    %v1156 = vmin.f32 %v1140, 6.0
    %v1157 = vmin.f32 %v1141, 6.0
    %v1158 = vmin.f32 %v1142, 6.0
    %v1159 = vmin.f32 %v1143, 6.0
    %v1160 = vmin.f32 %v1144, 6.0
    %v1161 = vmul.f32 %v1035, %v1145
    %v1162 = vmul.f32 %v1040, %v1146
    %v1163 = vmul.f32 %v1045, %v1147
    %v1164 = vmul.f32 %v1050, %v1148
    %v1165 = vmul.f32 %v1055, %v1149
    %v1166 = vmul.f32 %v1060, %v1150
    %v1167 = vmul.f32 %v1065, %v1151
    %v1168 = vmul.f32 %v1070, %v1152
    %v1169 = vmul.f32 %v1075, %v1153
    %v1170 = vmul.f32 %v1080, %v1154
    %v1171 = vmul.f32 %v1085, %v1155
    %v1172 = vmul.f32 %v1090, %v1156
    %v1173 = vmul.f32 %v1095, %v1157
    %v1174 = vmul.f32 %v1100, %v1158
    %v1175 = vmul.f32 %v1105, %v1159
    %v1176 = vmul.f32 %v1110, %v1160
    %v1177 = vmul.f32 %v1161, 0.16666667
    %v1178 = vmul.f32 %v1162, 0.16666667
    %v1179 = vmul.f32 %v1163, 0.16666667
    %v1180 = vmul.f32 %v1164, 0.16666667
    %v1181 = vmul.f32 %v1165, 0.16666667
    %v1182 = vmul.f32 %v1166, 0.16666667
    %v1183 = vmul.f32 %v1167, 0.16666667
    %v1184 = vmul.f32 %v1168, 0.16666667
    %v1185 = vmul.f32 %v1169, 0.16666667
    %v1186 = vmul.f32 %v1170, 0.16666667
    %v1187 = vmul.f32 %v1171, 0.16666667
    %v1188 = vmul.f32 %v1172, 0.16666667
    %v1189 = vmul.f32 %v1173, 0.16666667
    %v1190 = vmul.f32 %v1174, 0.16666667
    %v1191 = vmul.f32 %v1175, 0.16666667
    %v1192 = vmul.f32 %v1176, 0.16666667
    %v1193 = vld [vmem:[%s3] sm:$0xff]
    %v1194 = vld [vmem:[%s4] sm:$0x1]
    %v1196 = vlaneseq
    %v1197 = vshrl.u32 %v1196, 7
    %v1198 = vsub.s32 0, %v1197
    %v1199 = vrot.slane %v1194, %v1198
    %vm1201 = vcmask 64512
    %v1203 = vsel %vm1201, %v1177, 0
    %v1206 = vsel %vm1201, %v1178, 0
    %v1209 = vsel %vm1201, %v1181, 0
    %v1212 = vsel %vm1201, %v1182, 0
    %v1215 = vsel %vm1201, %v1185, 0
    %v1218 = vsel %vm1201, %v1186, 0
    %v1221 = vsel %vm1201, %v1189, 0
    %v1224 = vsel %vm1201, %v1190, 0
    %1226 = vmatprep.subr.mxu0 0.0
    %1227 = vmatpush1.msra.mxu0 %v1193
    %1228 = vmatprep.subr.mxu0 0.0
    %1229 = vmatpush1.msra.mxu0 0.0
    %1230 = vmatprep.subr.mxu0 0.0
    %1231 = vmatpush1.msra.mxu0 0.0
    %1232 = vmatprep.subr.mxu0 0.0
    %1233 = vmatpush1.msra.mxu0 0.0
    %1234 = vmatprep.subr.mxu0 0.0
    %1235 = vmatpush1.msra.mxu0 0.0
    %1236 = vmatprep.subr.mxu0 0.0
    %1237 = vmatpush1.msra.mxu0 0.0
    %1238 = vmatprep.subr.mxu0 0.0
    %1239 = vmatpush1.msra.mxu0 0.0
    %1240 = vmatprep.subr.mxu0 0.0
    %1241 = vmatpush1.msra.mxu0 0.0
    %1242 = vmatprep.subr.mxu0 0.0
    %1243 = vmatpush1.msra.mxu0 0.0
    %1244 = vmatprep.subr.mxu0 0.0
    %1245 = vmatpush1.msra.mxu0 0.0
    %1246 = vmatprep.subr.mxu0 0.0
    %1247 = vmatpush1.msra.mxu0 0.0
    %1248 = vmatprep.subr.mxu0 0.0
    %1249 = vmatpush1.msra.mxu0 0.0
    %1250 = vmatprep.subr.mxu0 0.0
    %1251 = vmatpush1.msra.mxu0 0.0
    %1252 = vmatprep.subr.mxu0 0.0
    %1253 = vmatpush1.msra.mxu0 0.0
    %1254 = vmatprep.subr.mxu0 0.0
    %1255 = vmatpush1.msra.mxu0 0.0
    %1256 = vmatprep.subr.mxu0 0.0
    %1257 = vmatpush1.msra.mxu0 0.0
    %1258 = vmatprep.subr.mxu0 0.0
    %1259 = vmatpush1.msra.mxu0 0.0
    %1260 = vmatprep.subr.mxu0 0.0
    %1261 = vmatpush1.msra.mxu0 0.0
    %1262 = vmatprep.subr.mxu0 0.0
    %1263 = vmatpush1.msra.mxu0 0.0
    %1264 = vmatprep.subr.mxu0 0.0
    %1265 = vmatpush1.msra.mxu0 0.0
    %1266 = vmatprep.subr.mxu0 0.0
    %1267 = vmatpush1.msra.mxu0 0.0
    %1268 = vmatprep.subr.mxu0 0.0
    %1269 = vmatpush1.msra.mxu0 0.0
    %1270 = vmatprep.subr.mxu0 0.0
    %1271 = vmatpush1.msra.mxu0 0.0
    %1272 = vmatprep.subr.mxu0 0.0
    %1273 = vmatpush1.msra.mxu0 0.0
    %1274 = vmatprep.subr.mxu0 0.0
    %1275 = vmatpush1.msra.mxu0 0.0
    %1276 = vmatprep.subr.mxu0 0.0
    %1277 = vmatpush1.msra.mxu0 0.0
    %1278 = vmatprep.subr.mxu0 0.0
    %1279 = vmatpush1.msra.mxu0 0.0
    %1280 = vmatprep.subr.mxu0 0.0
    %1281 = vmatpush1.msra.mxu0 0.0
    %1282 = vmatprep.subr.mxu0 0.0
    %1283 = vmatpush1.msra.mxu0 0.0
    %1284 = vmatprep.subr.mxu0 0.0
    %1285 = vmatpush1.msra.mxu0 0.0
    %1286 = vmatprep.subr.mxu0 0.0
    %1287 = vmatpush1.msra.mxu0 0.0
    %1288 = vmatprep.subr.mxu0 0.0
    %1289 = vmatpush1.msra.mxu0 0.0
    %1290 = vmatprep.mubr.f32.mxu0 0.0
    %1291 = vmatmul.mubr.f32.gmra.mrb[0].mxu0 %v1203
    %v1292 = vpop.f32.mrb[0].mxu0
    %v1293 = vadd.f32 %v1199, %v1292
    %v1294 = vpop.f32.mrb[0].mxu0
    %1295 = vmatprep.mubr.f32.mxu0 0.0
    %1296 = vmatmul.mubr.f32.gmra.mrb[0].mxu0 %v1206
    %v1297 = vpop.f32.mrb[0].mxu0
    %v1298 = vadd.f32 %v1199, %v1297
    %v1299 = vpop.f32.mrb[0].mxu0
    %1300 = vmatprep.mubr.f32.mxu0 0.0
    %1301 = vmatmul.mubr.f32.gmra.mrb[0].mxu0 %v1209
    %v1302 = vpop.f32.mrb[0].mxu0
    %v1303 = vadd.f32 %v1199, %v1302
    %v1304 = vpop.f32.mrb[0].mxu0
    %1305 = vmatprep.mubr.f32.mxu0 0.0
    %1306 = vmatmul.mubr.f32.gmra.mrb[0].mxu0 %v1212
    %v1307 = vpop.f32.mrb[0].mxu0
    %v1308 = vadd.f32 %v1199, %v1307
    %v1309 = vpop.f32.mrb[0].mxu0
    %1310 = vmatprep.mubr.f32.mxu0 0.0
    %1311 = vmatmul.mubr.f32.gmra.mrb[0].mxu0 %v1215
    %v1312 = vpop.f32.mrb[0].mxu0
    %v1313 = vadd.f32 %v1199, %v1312
    %v1314 = vpop.f32.mrb[0].mxu0
    %1315 = vmatprep.mubr.f32.mxu0 0.0
    %1316 = vmatmul.mubr.f32.gmra.mrb[0].mxu0 %v1218
    %v1317 = vpop.f32.mrb[0].mxu0
    %v1318 = vadd.f32 %v1199, %v1317
    %v1319 = vpop.f32.mrb[0].mxu0
    %1320 = vmatprep.mubr.f32.mxu0 0.0
    %1321 = vmatmul.mubr.f32.gmra.mrb[0].mxu0 %v1221
    %v1322 = vpop.f32.mrb[0].mxu0
    %v1323 = vadd.f32 %v1199, %v1322
    %v1324 = vpop.f32.mrb[0].mxu0
    %1325 = vmatprep.mubr.f32.mxu0 0.0
    %1326 = vmatmul.mubr.f32.gmra.mrb[0].mxu0 %v1224
    %v1327 = vpop.f32.mrb[0].mxu0
    %v1328 = vadd.f32 %v1199, %v1327
    %v1329 = vpop.f32.mrb[0].mxu0
    %1330 = vdwg.mxu0
    %v1331 = vxor.u32 %v1293, 2147483648
    %v1332 = vxor.u32 %v1298, 2147483648
    %v1333 = vxor.u32 %v1303, 2147483648
    %v1334 = vxor.u32 %v1308, 2147483648
    %v1335 = vxor.u32 %v1313, 2147483648
    %v1336 = vxor.u32 %v1318, 2147483648
    %v1337 = vxor.u32 %v1323, 2147483648
    %v1338 = vxor.u32 %v1328, 2147483648
    %v1339 = vmul.f32 %v1331, 1.442695
    %v1340 = vpow.pop %v1339
    %v1341 = vmul.f32 %v1332, 1.442695
    %v1342 = vpow.pop %v1341
    %v1343 = vmul.f32 %v1333, 1.442695
    %v1344 = vpow.pop %v1343
    %v1345 = vmul.f32 %v1334, 1.442695
    %v1346 = vpow.pop %v1345
    %v1347 = vmul.f32 %v1335, 1.442695
    %v1348 = vpow.pop %v1347
    %v1349 = vmul.f32 %v1336, 1.442695
    %v1350 = vpow.pop %v1349
    %v1351 = vmul.f32 %v1337, 1.442695
    %v1352 = vpow.pop %v1351
    %v1353 = vmul.f32 %v1338, 1.442695
    %v1354 = vpow.pop %v1353
    %v1355 = vadd.f32 %v1340, 1.0
    %v1356 = vadd.f32 %v1342, 1.0
    %v1357 = vadd.f32 %v1344, 1.0
    %v1358 = vadd.f32 %v1346, 1.0
    %v1359 = vadd.f32 %v1348, 1.0
    %v1360 = vadd.f32 %v1350, 1.0
    %v1361 = vadd.f32 %v1352, 1.0
    %v1362 = vadd.f32 %v1354, 1.0
    %v1363 = vrcp.pop %v1355
    %v1364 = vmul.f32 1.0, %v1363
    %v1365 = vrcp.pop %v1356
    %v1366 = vmul.f32 1.0, %v1365
    %v1367 = vrcp.pop %v1357
    %v1368 = vmul.f32 1.0, %v1367
    %v1369 = vrcp.pop %v1358
    %v1370 = vmul.f32 1.0, %v1369
    %v1371 = vrcp.pop %v1359
    %v1372 = vmul.f32 1.0, %v1371
    %v1373 = vrcp.pop %v1360
    %v1374 = vmul.f32 1.0, %v1373
    %v1375 = vrcp.pop %v1361
    %v1376 = vmul.f32 1.0, %v1375
    %v1377 = vrcp.pop %v1362
    %v1378 = vmul.f32 1.0, %v1377
    %v1387 = vcombine.high %v1364, %v1364
    %v1389 = vunpack.c.l.s4 1966171168
    %v1390 = vunpack.c.0.s8 %v1389
    %v1391 = vlaneseq
    %v1392 = vshrl.u32 %v1391, 7
    %v1393 = vsub.s32 %v1390, %v1392
    %v1394 = vrot.slane %v1364, %v1393
    %v1396 = vunpack.c.l.s4 1966171168
    %v1397 = vunpack.c.0.s8 %v1396
    %v1398 = vlaneseq
    %v1399 = vshrl.u32 %v1398, 7
    %v1400 = vsub.s32 %v1397, %v1399
    %v1401 = vrot.slane %v1387, %v1400
    %v1402 = vcombine.high %v1394, %v1394
    %v1403 = vcombine.high %v1401, %v1401
    %v1405 = vunpack.c.l.s4 1966171168
    %v1406 = vunpack.c.0.s8 %v1405
    %v1407 = vlaneseq
    %v1408 = vshrl.u32 %v1407, 7
    %v1409 = vsub.s32 %v1406, %v1408
    %v1410 = vrot.slane %v1394, %v1409
    %v1412 = vunpack.c.l.s4 1966171168
    %v1413 = vunpack.c.0.s8 %v1412
    %v1414 = vlaneseq
    %v1415 = vshrl.u32 %v1414, 7
    %v1416 = vsub.s32 %v1413, %v1415
    %v1417 = vrot.slane %v1401, %v1416
    %v1419 = vunpack.c.l.s4 1966171168
    %v1420 = vunpack.c.0.s8 %v1419
    %v1421 = vlaneseq
    %v1422 = vshrl.u32 %v1421, 7
    %v1423 = vsub.s32 %v1420, %v1422
    %v1424 = vrot.slane %v1402, %v1423
    %v1426 = vunpack.c.l.s4 1966171168
    %v1427 = vunpack.c.0.s8 %v1426
    %v1428 = vlaneseq
    %v1429 = vshrl.u32 %v1428, 7
    %v1430 = vsub.s32 %v1427, %v1429
    %v1431 = vrot.slane %v1403, %v1430
    %v1432 = vcombine.high %v1410, %v1410
    %v1433 = vcombine.high %v1417, %v1417
    %v1434 = vcombine.high %v1424, %v1424
    %v1435 = vcombine.high %v1431, %v1431
    %v1436 = vcombine.high %v1366, %v1366
    %v1438 = vunpack.c.l.s4 1966171168
    %v1439 = vunpack.c.0.s8 %v1438
    %v1440 = vlaneseq
    %v1441 = vshrl.u32 %v1440, 7
    %v1442 = vsub.s32 %v1439, %v1441
    %v1443 = vrot.slane %v1366, %v1442
    %v1445 = vunpack.c.l.s4 1966171168
    %v1446 = vunpack.c.0.s8 %v1445
    %v1447 = vlaneseq
    %v1448 = vshrl.u32 %v1447, 7
    %v1449 = vsub.s32 %v1446, %v1448
    %v1450 = vrot.slane %v1436, %v1449
    %v1451 = vcombine.high %v1443, %v1443
    %v1452 = vcombine.high %v1450, %v1450
    %v1454 = vunpack.c.l.s4 1966171168
    %v1455 = vunpack.c.0.s8 %v1454
    %v1456 = vlaneseq
    %v1457 = vshrl.u32 %v1456, 7
    %v1458 = vsub.s32 %v1455, %v1457
    %v1459 = vrot.slane %v1443, %v1458
    %v1461 = vunpack.c.l.s4 1966171168
    %v1462 = vunpack.c.0.s8 %v1461
    %v1463 = vlaneseq
    %v1464 = vshrl.u32 %v1463, 7
    %v1465 = vsub.s32 %v1462, %v1464
    %v1466 = vrot.slane %v1450, %v1465
    %v1468 = vunpack.c.l.s4 1966171168
    %v1469 = vunpack.c.0.s8 %v1468
    %v1470 = vlaneseq
    %v1471 = vshrl.u32 %v1470, 7
    %v1472 = vsub.s32 %v1469, %v1471
    %v1473 = vrot.slane %v1451, %v1472
    %v1475 = vunpack.c.l.s4 1966171168
    %v1476 = vunpack.c.0.s8 %v1475
    %v1477 = vlaneseq
    %v1478 = vshrl.u32 %v1477, 7
    %v1479 = vsub.s32 %v1476, %v1478
    %v1480 = vrot.slane %v1452, %v1479
    %v1481 = vcombine.high %v1459, %v1459
    %v1482 = vcombine.high %v1466, %v1466
    %v1483 = vcombine.high %v1473, %v1473
    %v1484 = vcombine.high %v1480, %v1480
    %v1485 = vcombine.high %v1368, %v1368
    %v1487 = vunpack.c.l.s4 1966171168
    %v1488 = vunpack.c.0.s8 %v1487
    %v1489 = vlaneseq
    %v1490 = vshrl.u32 %v1489, 7
    %v1491 = vsub.s32 %v1488, %v1490
    %v1492 = vrot.slane %v1368, %v1491
    %v1494 = vunpack.c.l.s4 1966171168
    %v1495 = vunpack.c.0.s8 %v1494
    %v1496 = vlaneseq
    %v1497 = vshrl.u32 %v1496, 7
    %v1498 = vsub.s32 %v1495, %v1497
    %v1499 = vrot.slane %v1485, %v1498
    %v1500 = vcombine.high %v1492, %v1492
    %v1501 = vcombine.high %v1499, %v1499
    %v1503 = vunpack.c.l.s4 1966171168
    %v1504 = vunpack.c.0.s8 %v1503
    %v1505 = vlaneseq
    %v1506 = vshrl.u32 %v1505, 7
    %v1507 = vsub.s32 %v1504, %v1506
    %v1508 = vrot.slane %v1492, %v1507
    %v1510 = vunpack.c.l.s4 1966171168
    %v1511 = vunpack.c.0.s8 %v1510
    %v1512 = vlaneseq
    %v1513 = vshrl.u32 %v1512, 7
    %v1514 = vsub.s32 %v1511, %v1513
    %v1515 = vrot.slane %v1499, %v1514
    %v1517 = vunpack.c.l.s4 1966171168
    %v1518 = vunpack.c.0.s8 %v1517
    %v1519 = vlaneseq
    %v1520 = vshrl.u32 %v1519, 7
    %v1521 = vsub.s32 %v1518, %v1520
    %v1522 = vrot.slane %v1500, %v1521
    %v1524 = vunpack.c.l.s4 1966171168
    %v1525 = vunpack.c.0.s8 %v1524
    %v1526 = vlaneseq
    %v1527 = vshrl.u32 %v1526, 7
    %v1528 = vsub.s32 %v1525, %v1527
    %v1529 = vrot.slane %v1501, %v1528
    %v1530 = vcombine.high %v1508, %v1508
    %v1531 = vcombine.high %v1515, %v1515
    %v1532 = vcombine.high %v1522, %v1522
    %v1533 = vcombine.high %v1529, %v1529
    %v1534 = vcombine.high %v1370, %v1370
    %v1536 = vunpack.c.l.s4 1966171168
    %v1537 = vunpack.c.0.s8 %v1536
    %v1538 = vlaneseq
    %v1539 = vshrl.u32 %v1538, 7
    %v1540 = vsub.s32 %v1537, %v1539
    %v1541 = vrot.slane %v1370, %v1540
    %v1543 = vunpack.c.l.s4 1966171168
    %v1544 = vunpack.c.0.s8 %v1543
    %v1545 = vlaneseq
    %v1546 = vshrl.u32 %v1545, 7
    %v1547 = vsub.s32 %v1544, %v1546
    %v1548 = vrot.slane %v1534, %v1547
    %v1549 = vcombine.high %v1541, %v1541
    %v1550 = vcombine.high %v1548, %v1548
    %v1552 = vunpack.c.l.s4 1966171168
    %v1553 = vunpack.c.0.s8 %v1552
    %v1554 = vlaneseq
    %v1555 = vshrl.u32 %v1554, 7
    %v1556 = vsub.s32 %v1553, %v1555
    %v1557 = vrot.slane %v1541, %v1556
    %v1559 = vunpack.c.l.s4 1966171168
    %v1560 = vunpack.c.0.s8 %v1559
    %v1561 = vlaneseq
    %v1562 = vshrl.u32 %v1561, 7
    %v1563 = vsub.s32 %v1560, %v1562
    %v1564 = vrot.slane %v1548, %v1563
    %v1566 = vunpack.c.l.s4 1966171168
    %v1567 = vunpack.c.0.s8 %v1566
    %v1568 = vlaneseq
    %v1569 = vshrl.u32 %v1568, 7
    %v1570 = vsub.s32 %v1567, %v1569
    %v1571 = vrot.slane %v1549, %v1570
    %v1573 = vunpack.c.l.s4 1966171168
    %v1574 = vunpack.c.0.s8 %v1573
    %v1575 = vlaneseq
    %v1576 = vshrl.u32 %v1575, 7
    %v1577 = vsub.s32 %v1574, %v1576
    %v1578 = vrot.slane %v1550, %v1577
    %v1579 = vcombine.high %v1557, %v1557
    %v1580 = vcombine.high %v1564, %v1564
    %v1581 = vcombine.high %v1571, %v1571
    %v1582 = vcombine.high %v1578, %v1578
    %v1583 = vcombine.high %v1372, %v1372
    %v1585 = vunpack.c.l.s4 1966171168
    %v1586 = vunpack.c.0.s8 %v1585
    %v1587 = vlaneseq
    %v1588 = vshrl.u32 %v1587, 7
    %v1589 = vsub.s32 %v1586, %v1588
    %v1590 = vrot.slane %v1372, %v1589
    %v1592 = vunpack.c.l.s4 1966171168
    %v1593 = vunpack.c.0.s8 %v1592
    %v1594 = vlaneseq
    %v1595 = vshrl.u32 %v1594, 7
    %v1596 = vsub.s32 %v1593, %v1595
    %v1597 = vrot.slane %v1583, %v1596
    %v1598 = vcombine.high %v1590, %v1590
    %v1599 = vcombine.high %v1597, %v1597
    %v1601 = vunpack.c.l.s4 1966171168
    %v1602 = vunpack.c.0.s8 %v1601
    %v1603 = vlaneseq
    %v1604 = vshrl.u32 %v1603, 7
    %v1605 = vsub.s32 %v1602, %v1604
    %v1606 = vrot.slane %v1590, %v1605
    %v1608 = vunpack.c.l.s4 1966171168
    %v1609 = vunpack.c.0.s8 %v1608
    %v1610 = vlaneseq
    %v1611 = vshrl.u32 %v1610, 7
    %v1612 = vsub.s32 %v1609, %v1611
    %v1613 = vrot.slane %v1597, %v1612
    %v1615 = vunpack.c.l.s4 1966171168
    %v1616 = vunpack.c.0.s8 %v1615
    %v1617 = vlaneseq
    %v1618 = vshrl.u32 %v1617, 7
    %v1619 = vsub.s32 %v1616, %v1618
    %v1620 = vrot.slane %v1598, %v1619
    %v1622 = vunpack.c.l.s4 1966171168
    %v1623 = vunpack.c.0.s8 %v1622
    %v1624 = vlaneseq
    %v1625 = vshrl.u32 %v1624, 7
    %v1626 = vsub.s32 %v1623, %v1625
    %v1627 = vrot.slane %v1599, %v1626
    %v1628 = vcombine.high %v1606, %v1606
    %v1629 = vcombine.high %v1613, %v1613
    %v1630 = vcombine.high %v1620, %v1620
    %v1631 = vcombine.high %v1627, %v1627
    %v1632 = vcombine.high %v1374, %v1374
    %v1634 = vunpack.c.l.s4 1966171168
    %v1635 = vunpack.c.0.s8 %v1634
    %v1636 = vlaneseq
    %v1637 = vshrl.u32 %v1636, 7
    %v1638 = vsub.s32 %v1635, %v1637
    %v1639 = vrot.slane %v1374, %v1638
    %v1641 = vunpack.c.l.s4 1966171168
    %v1642 = vunpack.c.0.s8 %v1641
    %v1643 = vlaneseq
    %v1644 = vshrl.u32 %v1643, 7
    %v1645 = vsub.s32 %v1642, %v1644
    %v1646 = vrot.slane %v1632, %v1645
    %v1647 = vcombine.high %v1639, %v1639
    %v1648 = vcombine.high %v1646, %v1646
    %v1650 = vunpack.c.l.s4 1966171168
    %v1651 = vunpack.c.0.s8 %v1650
    %v1652 = vlaneseq
    %v1653 = vshrl.u32 %v1652, 7
    %v1654 = vsub.s32 %v1651, %v1653
    %v1655 = vrot.slane %v1639, %v1654
    %v1657 = vunpack.c.l.s4 1966171168
    %v1658 = vunpack.c.0.s8 %v1657
    %v1659 = vlaneseq
    %v1660 = vshrl.u32 %v1659, 7
    %v1661 = vsub.s32 %v1658, %v1660
    %v1662 = vrot.slane %v1646, %v1661
    %v1664 = vunpack.c.l.s4 1966171168
    %v1665 = vunpack.c.0.s8 %v1664
    %v1666 = vlaneseq
    %v1667 = vshrl.u32 %v1666, 7
    %v1668 = vsub.s32 %v1665, %v1667
    %v1669 = vrot.slane %v1647, %v1668
    %v1671 = vunpack.c.l.s4 1966171168
    %v1672 = vunpack.c.0.s8 %v1671
    %v1673 = vlaneseq
    %v1674 = vshrl.u32 %v1673, 7
    %v1675 = vsub.s32 %v1672, %v1674
    %v1676 = vrot.slane %v1648, %v1675
    %v1677 = vcombine.high %v1655, %v1655
    %v1678 = vcombine.high %v1662, %v1662
    %v1679 = vcombine.high %v1669, %v1669
    %v1680 = vcombine.high %v1676, %v1676
    %v1681 = vcombine.high %v1376, %v1376
    %v1683 = vunpack.c.l.s4 1966171168
    %v1684 = vunpack.c.0.s8 %v1683
    %v1685 = vlaneseq
    %v1686 = vshrl.u32 %v1685, 7
    %v1687 = vsub.s32 %v1684, %v1686
    %v1688 = vrot.slane %v1376, %v1687
    %v1690 = vunpack.c.l.s4 1966171168
    %v1691 = vunpack.c.0.s8 %v1690
    %v1692 = vlaneseq
    %v1693 = vshrl.u32 %v1692, 7
    %v1694 = vsub.s32 %v1691, %v1693
    %v1695 = vrot.slane %v1681, %v1694
    %v1696 = vcombine.high %v1688, %v1688
    %v1697 = vcombine.high %v1695, %v1695
    %v1699 = vunpack.c.l.s4 1966171168
    %v1700 = vunpack.c.0.s8 %v1699
    %v1701 = vlaneseq
    %v1702 = vshrl.u32 %v1701, 7
    %v1703 = vsub.s32 %v1700, %v1702
    %v1704 = vrot.slane %v1688, %v1703
    %v1706 = vunpack.c.l.s4 1966171168
    %v1707 = vunpack.c.0.s8 %v1706
    %v1708 = vlaneseq
    %v1709 = vshrl.u32 %v1708, 7
    %v1710 = vsub.s32 %v1707, %v1709
    %v1711 = vrot.slane %v1695, %v1710
    %v1713 = vunpack.c.l.s4 1966171168
    %v1714 = vunpack.c.0.s8 %v1713
    %v1715 = vlaneseq
    %v1716 = vshrl.u32 %v1715, 7
    %v1717 = vsub.s32 %v1714, %v1716
    %v1718 = vrot.slane %v1696, %v1717
    %v1720 = vunpack.c.l.s4 1966171168
    %v1721 = vunpack.c.0.s8 %v1720
    %v1722 = vlaneseq
    %v1723 = vshrl.u32 %v1722, 7
    %v1724 = vsub.s32 %v1721, %v1723
    %v1725 = vrot.slane %v1697, %v1724
    %v1726 = vcombine.high %v1704, %v1704
    %v1727 = vcombine.high %v1711, %v1711
    %v1728 = vcombine.high %v1718, %v1718
    %v1729 = vcombine.high %v1725, %v1725
    %v1730 = vcombine.high %v1378, %v1378
    %v1732 = vunpack.c.l.s4 1966171168
    %v1733 = vunpack.c.0.s8 %v1732
    %v1734 = vlaneseq
    %v1735 = vshrl.u32 %v1734, 7
    %v1736 = vsub.s32 %v1733, %v1735
    %v1737 = vrot.slane %v1378, %v1736
    %v1739 = vunpack.c.l.s4 1966171168
    %v1740 = vunpack.c.0.s8 %v1739
    %v1741 = vlaneseq
    %v1742 = vshrl.u32 %v1741, 7
    %v1743 = vsub.s32 %v1740, %v1742
    %v1744 = vrot.slane %v1730, %v1743
    %v1745 = vcombine.high %v1737, %v1737
    %v1746 = vcombine.high %v1744, %v1744
    %v1748 = vunpack.c.l.s4 1966171168
    %v1749 = vunpack.c.0.s8 %v1748
    %v1750 = vlaneseq
    %v1751 = vshrl.u32 %v1750, 7
    %v1752 = vsub.s32 %v1749, %v1751
    %v1753 = vrot.slane %v1737, %v1752
    %v1755 = vunpack.c.l.s4 1966171168
    %v1756 = vunpack.c.0.s8 %v1755
    %v1757 = vlaneseq
    %v1758 = vshrl.u32 %v1757, 7
    %v1759 = vsub.s32 %v1756, %v1758
    %v1760 = vrot.slane %v1744, %v1759
    %v1762 = vunpack.c.l.s4 1966171168
    %v1763 = vunpack.c.0.s8 %v1762
    %v1764 = vlaneseq
    %v1765 = vshrl.u32 %v1764, 7
    %v1766 = vsub.s32 %v1763, %v1765
    %v1767 = vrot.slane %v1745, %v1766
    %v1769 = vunpack.c.l.s4 1966171168
    %v1770 = vunpack.c.0.s8 %v1769
    %v1771 = vlaneseq
    %v1772 = vshrl.u32 %v1771, 7
    %v1773 = vsub.s32 %v1770, %v1772
    %v1774 = vrot.slane %v1746, %v1773
    %v1775 = vcombine.high %v1753, %v1753
    %v1776 = vcombine.high %v1760, %v1760
    %v1777 = vcombine.high %v1767, %v1767
    %v1778 = vcombine.high %v1774, %v1774
    %v1779 = vld [vmem:[%s5] sm:$0xff]
    %v1780 = vld [vmem:[%s6] sm:$0x1]
    %v1782 = vlaneseq
    %v1783 = vshrl.u32 %v1782, 7
    %v1784 = vsub.s32 0, %v1783
    %v1785 = vrot.slane %v1780, %v1784
    %v1788 = vsel %vm1201, %v1179, 0
    %v1791 = vsel %vm1201, %v1180, 0
    %v1794 = vsel %vm1201, %v1183, 0
    %v1797 = vsel %vm1201, %v1184, 0
    %v1800 = vsel %vm1201, %v1187, 0
    %v1803 = vsel %vm1201, %v1188, 0
    %v1806 = vsel %vm1201, %v1191, 0
    %v1809 = vsel %vm1201, %v1192, 0
    %1811 = vmatprep.subr.mxu0 0.0
    %1812 = vmatpush1.msra.mxu0 %v1779
    %1813 = vmatprep.subr.mxu0 0.0
    %1814 = vmatpush1.msra.mxu0 0.0
    %1815 = vmatprep.subr.mxu0 0.0
    %1816 = vmatpush1.msra.mxu0 0.0
    %1817 = vmatprep.subr.mxu0 0.0
    %1818 = vmatpush1.msra.mxu0 0.0
    %1819 = vmatprep.subr.mxu0 0.0
    %1820 = vmatpush1.msra.mxu0 0.0
    %1821 = vmatprep.subr.mxu0 0.0
    %1822 = vmatpush1.msra.mxu0 0.0
    %1823 = vmatprep.subr.mxu0 0.0
    %1824 = vmatpush1.msra.mxu0 0.0
    %1825 = vmatprep.subr.mxu0 0.0
    %1826 = vmatpush1.msra.mxu0 0.0
    %1827 = vmatprep.subr.mxu0 0.0
    %1828 = vmatpush1.msra.mxu0 0.0
    %1829 = vmatprep.subr.mxu0 0.0
    %1830 = vmatpush1.msra.mxu0 0.0
    %1831 = vmatprep.subr.mxu0 0.0
    %1832 = vmatpush1.msra.mxu0 0.0
    %1833 = vmatprep.subr.mxu0 0.0
    %1834 = vmatpush1.msra.mxu0 0.0
    %1835 = vmatprep.subr.mxu0 0.0
    %1836 = vmatpush1.msra.mxu0 0.0
    %1837 = vmatprep.subr.mxu0 0.0
    %1838 = vmatpush1.msra.mxu0 0.0
    %1839 = vmatprep.subr.mxu0 0.0
    %1840 = vmatpush1.msra.mxu0 0.0
    %1841 = vmatprep.subr.mxu0 0.0
    %1842 = vmatpush1.msra.mxu0 0.0
    %1843 = vmatprep.subr.mxu0 0.0
    %1844 = vmatpush1.msra.mxu0 0.0
    %1845 = vmatprep.subr.mxu0 0.0
    %1846 = vmatpush1.msra.mxu0 0.0
    %1847 = vmatprep.subr.mxu0 0.0
    %1848 = vmatpush1.msra.mxu0 0.0
    %1849 = vmatprep.subr.mxu0 0.0
    %1850 = vmatpush1.msra.mxu0 0.0
    %1851 = vmatprep.subr.mxu0 0.0
    %1852 = vmatpush1.msra.mxu0 0.0
    %1853 = vmatprep.subr.mxu0 0.0
    %1854 = vmatpush1.msra.mxu0 0.0
    %1855 = vmatprep.subr.mxu0 0.0
    %1856 = vmatpush1.msra.mxu0 0.0
    %1857 = vmatprep.subr.mxu0 0.0
    %1858 = vmatpush1.msra.mxu0 0.0
    %1859 = vmatprep.subr.mxu0 0.0
    %1860 = vmatpush1.msra.mxu0 0.0
    %1861 = vmatprep.subr.mxu0 0.0
    %1862 = vmatpush1.msra.mxu0 0.0
    %1863 = vmatprep.subr.mxu0 0.0
    %1864 = vmatpush1.msra.mxu0 0.0
    %1865 = vmatprep.subr.mxu0 0.0
    %1866 = vmatpush1.msra.mxu0 0.0
    %1867 = vmatprep.subr.mxu0 0.0
    %1868 = vmatpush1.msra.mxu0 0.0
    %1869 = vmatprep.subr.mxu0 0.0
    %1870 = vmatpush1.msra.mxu0 0.0
    %1871 = vmatprep.subr.mxu0 0.0
    %1872 = vmatpush1.msra.mxu0 0.0
    %1873 = vmatprep.subr.mxu0 0.0
    %1874 = vmatpush1.msra.mxu0 0.0
    %1875 = vmatprep.mubr.f32.mxu0 0.0
    %1876 = vmatmul.mubr.f32.gmra.mrb[0].mxu0 %v1788
    %v1877 = vpop.f32.mrb[0].mxu0
    %v1878 = vadd.f32 %v1785, %v1877
    %v1879 = vpop.f32.mrb[0].mxu0
    %1880 = vmatprep.mubr.f32.mxu0 0.0
    %1881 = vmatmul.mubr.f32.gmra.mrb[0].mxu0 %v1791
    %v1882 = vpop.f32.mrb[0].mxu0
    %v1883 = vadd.f32 %v1785, %v1882
    %v1884 = vpop.f32.mrb[0].mxu0
    %1885 = vmatprep.mubr.f32.mxu0 0.0
    %1886 = vmatmul.mubr.f32.gmra.mrb[0].mxu0 %v1794
    %v1887 = vpop.f32.mrb[0].mxu0
    %v1888 = vadd.f32 %v1785, %v1887
    %v1889 = vpop.f32.mrb[0].mxu0
    %1890 = vmatprep.mubr.f32.mxu0 0.0
    %1891 = vmatmul.mubr.f32.gmra.mrb[0].mxu0 %v1797
    %v1892 = vpop.f32.mrb[0].mxu0
    %v1893 = vadd.f32 %v1785, %v1892
    %v1894 = vpop.f32.mrb[0].mxu0
    %1895 = vmatprep.mubr.f32.mxu0 0.0
    %1896 = vmatmul.mubr.f32.gmra.mrb[0].mxu0 %v1800
    %v1897 = vpop.f32.mrb[0].mxu0
    %v1898 = vadd.f32 %v1785, %v1897
    %v1899 = vpop.f32.mrb[0].mxu0
    %1900 = vmatprep.mubr.f32.mxu0 0.0
    %1901 = vmatmul.mubr.f32.gmra.mrb[0].mxu0 %v1803
    %v1902 = vpop.f32.mrb[0].mxu0
    %v1903 = vadd.f32 %v1785, %v1902
    %v1904 = vpop.f32.mrb[0].mxu0
    %1905 = vmatprep.mubr.f32.mxu0 0.0
    %1906 = vmatmul.mubr.f32.gmra.mrb[0].mxu0 %v1806
    %v1907 = vpop.f32.mrb[0].mxu0
    %v1908 = vadd.f32 %v1785, %v1907
    %v1909 = vpop.f32.mrb[0].mxu0
    %1910 = vmatprep.mubr.f32.mxu0 0.0
    %1911 = vmatmul.mubr.f32.gmra.mrb[0].mxu0 %v1809
    %v1912 = vpop.f32.mrb[0].mxu0
    %v1913 = vadd.f32 %v1785, %v1912
    %v1914 = vpop.f32.mrb[0].mxu0
    %1915 = vdwg.mxu0
    %v1916 = vxor.u32 %v1878, 2147483648
    %v1917 = vxor.u32 %v1883, 2147483648
    %v1918 = vxor.u32 %v1888, 2147483648
    %v1919 = vxor.u32 %v1893, 2147483648
    %v1920 = vxor.u32 %v1898, 2147483648
    %v1921 = vxor.u32 %v1903, 2147483648
    %v1922 = vxor.u32 %v1908, 2147483648
    %v1923 = vxor.u32 %v1913, 2147483648
    %v1924 = vmul.f32 %v1916, 1.442695
    %v1925 = vpow.pop %v1924
    %v1926 = vmul.f32 %v1917, 1.442695
    %v1927 = vpow.pop %v1926
    %v1928 = vmul.f32 %v1918, 1.442695
    %v1929 = vpow.pop %v1928
    %v1930 = vmul.f32 %v1919, 1.442695
    %v1931 = vpow.pop %v1930
    %v1932 = vmul.f32 %v1920, 1.442695
    %v1933 = vpow.pop %v1932
    %v1934 = vmul.f32 %v1921, 1.442695
    %v1935 = vpow.pop %v1934
    %v1936 = vmul.f32 %v1922, 1.442695
    %v1937 = vpow.pop %v1936
    %v1938 = vmul.f32 %v1923, 1.442695
    %v1939 = vpow.pop %v1938
    %v1940 = vadd.f32 %v1925, 1.0
    %v1941 = vadd.f32 %v1927, 1.0
    %v1942 = vadd.f32 %v1929, 1.0
    %v1943 = vadd.f32 %v1931, 1.0
    %v1944 = vadd.f32 %v1933, 1.0
    %v1945 = vadd.f32 %v1935, 1.0
    %v1946 = vadd.f32 %v1937, 1.0
    %v1947 = vadd.f32 %v1939, 1.0
    %v1948 = vrcp.pop %v1940
    %v1949 = vmul.f32 1.0, %v1948
    %v1950 = vrcp.pop %v1941
    %v1951 = vmul.f32 1.0, %v1950
    %v1952 = vrcp.pop %v1942
    %v1953 = vmul.f32 1.0, %v1952
    %v1954 = vrcp.pop %v1943
    %v1955 = vmul.f32 1.0, %v1954
    %v1956 = vrcp.pop %v1944
    %v1957 = vmul.f32 1.0, %v1956
    %v1958 = vrcp.pop %v1945
    %v1959 = vmul.f32 1.0, %v1958
    %v1960 = vrcp.pop %v1946
    %v1961 = vmul.f32 1.0, %v1960
    %v1962 = vrcp.pop %v1947
    %v1963 = vmul.f32 1.0, %v1962
    %v1964 = vlaneseq
    %v1965 = vshrl.u32 %v1964, 7
    %v1966 = vsub.s32 0, %v1965
    %v1967 = vrot.slane %v1410, %v1966
    %v1968 = vlaneseq
    %v1969 = vshrl.u32 %v1968, 7
    %v1970 = vsub.s32 0, %v1969
    %v1971 = vrot.slane %v1424, %v1970
    %v1972 = vlaneseq
    %v1973 = vshrl.u32 %v1972, 7
    %v1974 = vsub.s32 0, %v1973
    %v1975 = vrot.slane %v1432, %v1974
    %v1976 = vlaneseq
    %v1977 = vshrl.u32 %v1976, 7
    %v1978 = vsub.s32 0, %v1977
    %v1979 = vrot.slane %v1434, %v1978
    %v1980 = vlaneseq
    %v1981 = vshrl.u32 %v1980, 7
    %v1982 = vsub.s32 0, %v1981
    %v1983 = vrot.slane %v1417, %v1982
    %v1984 = vlaneseq
    %v1985 = vshrl.u32 %v1984, 7
    %v1986 = vsub.s32 0, %v1985
    %v1987 = vrot.slane %v1431, %v1986
    %v1988 = vlaneseq
    %v1989 = vshrl.u32 %v1988, 7
    %v1990 = vsub.s32 0, %v1989
    %v1991 = vrot.slane %v1433, %v1990
    %v1992 = vlaneseq
    %v1993 = vshrl.u32 %v1992, 7
    %v1994 = vsub.s32 0, %v1993
    %v1995 = vrot.slane %v1435, %v1994
    %v1996 = vlaneseq
    %v1997 = vshrl.u32 %v1996, 7
    %v1998 = vsub.s32 0, %v1997
    %v1999 = vrot.slane %v1459, %v1998
    %v2000 = vlaneseq
    %v2001 = vshrl.u32 %v2000, 7
    %v2002 = vsub.s32 0, %v2001
    %v2003 = vrot.slane %v1473, %v2002
    %v2004 = vlaneseq
    %v2005 = vshrl.u32 %v2004, 7
    %v2006 = vsub.s32 0, %v2005
    %v2007 = vrot.slane %v1481, %v2006
    %v2008 = vlaneseq
    %v2009 = vshrl.u32 %v2008, 7
    %v2010 = vsub.s32 0, %v2009
    %v2011 = vrot.slane %v1483, %v2010
    %v2012 = vlaneseq
    %v2013 = vshrl.u32 %v2012, 7
    %v2014 = vsub.s32 0, %v2013
    %v2015 = vrot.slane %v1466, %v2014
    %v2016 = vlaneseq
    %v2017 = vshrl.u32 %v2016, 7
    %v2018 = vsub.s32 0, %v2017
    %v2019 = vrot.slane %v1480, %v2018
    %v2020 = vlaneseq
    %v2021 = vshrl.u32 %v2020, 7
    %v2022 = vsub.s32 0, %v2021
    %v2023 = vrot.slane %v1482, %v2022
    %v2024 = vlaneseq
    %v2025 = vshrl.u32 %v2024, 7
    %v2026 = vsub.s32 0, %v2025
    %v2027 = vrot.slane %v1484, %v2026
    %v2028 = vlaneseq
    %v2029 = vshrl.u32 %v2028, 7
    %v2030 = vsub.s32 0, %v2029
    %v2031 = vrot.slane %v1508, %v2030
    %v2032 = vlaneseq
    %v2033 = vshrl.u32 %v2032, 7
    %v2034 = vsub.s32 0, %v2033
    %v2035 = vrot.slane %v1522, %v2034
    %v2036 = vlaneseq
    %v2037 = vshrl.u32 %v2036, 7
    %v2038 = vsub.s32 0, %v2037
    %v2039 = vrot.slane %v1530, %v2038
    %v2040 = vlaneseq
    %v2041 = vshrl.u32 %v2040, 7
    %v2042 = vsub.s32 0, %v2041
    %v2043 = vrot.slane %v1532, %v2042
    %v2044 = vlaneseq
    %v2045 = vshrl.u32 %v2044, 7
    %v2046 = vsub.s32 0, %v2045
    %v2047 = vrot.slane %v1515, %v2046
    %v2048 = vlaneseq
    %v2049 = vshrl.u32 %v2048, 7
    %v2050 = vsub.s32 0, %v2049
    %v2051 = vrot.slane %v1529, %v2050
    %v2052 = vlaneseq
    %v2053 = vshrl.u32 %v2052, 7
    %v2054 = vsub.s32 0, %v2053
    %v2055 = vrot.slane %v1531, %v2054
    %v2056 = vlaneseq
    %v2057 = vshrl.u32 %v2056, 7
    %v2058 = vsub.s32 0, %v2057
    %v2059 = vrot.slane %v1533, %v2058
    %v2060 = vlaneseq
    %v2061 = vshrl.u32 %v2060, 7
    %v2062 = vsub.s32 0, %v2061
    %v2063 = vrot.slane %v1557, %v2062
    %v2064 = vlaneseq
    %v2065 = vshrl.u32 %v2064, 7
    %v2066 = vsub.s32 0, %v2065
    %v2067 = vrot.slane %v1571, %v2066
    %v2068 = vlaneseq
    %v2069 = vshrl.u32 %v2068, 7
    %v2070 = vsub.s32 0, %v2069
    %v2071 = vrot.slane %v1579, %v2070
    %v2072 = vlaneseq
    %v2073 = vshrl.u32 %v2072, 7
    %v2074 = vsub.s32 0, %v2073
    %v2075 = vrot.slane %v1581, %v2074
    %v2076 = vlaneseq
    %v2077 = vshrl.u32 %v2076, 7
    %v2078 = vsub.s32 0, %v2077
    %v2079 = vrot.slane %v1564, %v2078
    %v2080 = vlaneseq
    %v2081 = vshrl.u32 %v2080, 7
    %v2082 = vsub.s32 0, %v2081
    %v2083 = vrot.slane %v1578, %v2082
    %v2084 = vlaneseq
    %v2085 = vshrl.u32 %v2084, 7
    %v2086 = vsub.s32 0, %v2085
    %v2087 = vrot.slane %v1580, %v2086
    %v2088 = vlaneseq
    %v2089 = vshrl.u32 %v2088, 7
    %v2090 = vsub.s32 0, %v2089
    %v2091 = vrot.slane %v1582, %v2090
    %v2092 = vlaneseq
    %v2093 = vshrl.u32 %v2092, 7
    %v2094 = vsub.s32 0, %v2093
    %v2095 = vrot.slane %v1606, %v2094
    %v2096 = vlaneseq
    %v2097 = vshrl.u32 %v2096, 7
    %v2098 = vsub.s32 0, %v2097
    %v2099 = vrot.slane %v1620, %v2098
    %v2100 = vlaneseq
    %v2101 = vshrl.u32 %v2100, 7
    %v2102 = vsub.s32 0, %v2101
    %v2103 = vrot.slane %v1628, %v2102
    %v2104 = vlaneseq
    %v2105 = vshrl.u32 %v2104, 7
    %v2106 = vsub.s32 0, %v2105
    %v2107 = vrot.slane %v1630, %v2106
    %v2108 = vlaneseq
    %v2109 = vshrl.u32 %v2108, 7
    %v2110 = vsub.s32 0, %v2109
    %v2111 = vrot.slane %v1613, %v2110
    %v2112 = vlaneseq
    %v2113 = vshrl.u32 %v2112, 7
    %v2114 = vsub.s32 0, %v2113
    %v2115 = vrot.slane %v1627, %v2114
    %v2116 = vlaneseq
    %v2117 = vshrl.u32 %v2116, 7
    %v2118 = vsub.s32 0, %v2117
    %v2119 = vrot.slane %v1629, %v2118
    %v2120 = vlaneseq
    %v2121 = vshrl.u32 %v2120, 7
    %v2122 = vsub.s32 0, %v2121
    %v2123 = vrot.slane %v1631, %v2122
    %v2124 = vlaneseq
    %v2125 = vshrl.u32 %v2124, 7
    %v2126 = vsub.s32 0, %v2125
    %v2127 = vrot.slane %v1655, %v2126
    %v2128 = vlaneseq
    %v2129 = vshrl.u32 %v2128, 7
    %v2130 = vsub.s32 0, %v2129
    %v2131 = vrot.slane %v1669, %v2130
    %v2132 = vlaneseq
    %v2133 = vshrl.u32 %v2132, 7
    %v2134 = vsub.s32 0, %v2133
    %v2135 = vrot.slane %v1677, %v2134
    %v2136 = vlaneseq
    %v2137 = vshrl.u32 %v2136, 7
    %v2138 = vsub.s32 0, %v2137
    %v2139 = vrot.slane %v1679, %v2138
    %v2140 = vlaneseq
    %v2141 = vshrl.u32 %v2140, 7
    %v2142 = vsub.s32 0, %v2141
    %v2143 = vrot.slane %v1662, %v2142
    %v2144 = vlaneseq
    %v2145 = vshrl.u32 %v2144, 7
    %v2146 = vsub.s32 0, %v2145
    %v2147 = vrot.slane %v1676, %v2146
    %v2148 = vlaneseq
    %v2149 = vshrl.u32 %v2148, 7
    %v2150 = vsub.s32 0, %v2149
    %v2151 = vrot.slane %v1678, %v2150
    %v2152 = vlaneseq
    %v2153 = vshrl.u32 %v2152, 7
    %v2154 = vsub.s32 0, %v2153
    %v2155 = vrot.slane %v1680, %v2154
    %v2156 = vlaneseq
    %v2157 = vshrl.u32 %v2156, 7
    %v2158 = vsub.s32 0, %v2157
    %v2159 = vrot.slane %v1704, %v2158
    %v2160 = vlaneseq
    %v2161 = vshrl.u32 %v2160, 7
    %v2162 = vsub.s32 0, %v2161
    %v2163 = vrot.slane %v1718, %v2162
    %v2164 = vlaneseq
    %v2165 = vshrl.u32 %v2164, 7
    %v2166 = vsub.s32 0, %v2165
    %v2167 = vrot.slane %v1726, %v2166
    %v2168 = vlaneseq
    %v2169 = vshrl.u32 %v2168, 7
    %v2170 = vsub.s32 0, %v2169
    %v2171 = vrot.slane %v1728, %v2170
    %v2172 = vlaneseq
    %v2173 = vshrl.u32 %v2172, 7
    %v2174 = vsub.s32 0, %v2173
    %v2175 = vrot.slane %v1711, %v2174
    %v2176 = vlaneseq
    %v2177 = vshrl.u32 %v2176, 7
    %v2178 = vsub.s32 0, %v2177
    %v2179 = vrot.slane %v1725, %v2178
    %v2180 = vlaneseq
    %v2181 = vshrl.u32 %v2180, 7
    %v2182 = vsub.s32 0, %v2181
    %v2183 = vrot.slane %v1727, %v2182
    %v2184 = vlaneseq
    %v2185 = vshrl.u32 %v2184, 7
    %v2186 = vsub.s32 0, %v2185
    %v2187 = vrot.slane %v1729, %v2186
    %v2188 = vlaneseq
    %v2189 = vshrl.u32 %v2188, 7
    %v2190 = vsub.s32 0, %v2189
    %v2191 = vrot.slane %v1753, %v2190
    %v2192 = vlaneseq
    %v2193 = vshrl.u32 %v2192, 7
    %v2194 = vsub.s32 0, %v2193
    %v2195 = vrot.slane %v1767, %v2194
    %v2196 = vlaneseq
    %v2197 = vshrl.u32 %v2196, 7
    %v2198 = vsub.s32 0, %v2197
    %v2199 = vrot.slane %v1775, %v2198
    %v2200 = vlaneseq
    %v2201 = vshrl.u32 %v2200, 7
    %v2202 = vsub.s32 0, %v2201
    %v2203 = vrot.slane %v1777, %v2202
    %v2204 = vlaneseq
    %v2205 = vshrl.u32 %v2204, 7
    %v2206 = vsub.s32 0, %v2205
    %v2207 = vrot.slane %v1760, %v2206
    %v2208 = vlaneseq
    %v2209 = vshrl.u32 %v2208, 7
    %v2210 = vsub.s32 0, %v2209
    %v2211 = vrot.slane %v1774, %v2210
    %v2212 = vlaneseq
    %v2213 = vshrl.u32 %v2212, 7
    %v2214 = vsub.s32 0, %v2213
    %v2215 = vrot.slane %v1776, %v2214
    %v2216 = vlaneseq
    %v2217 = vshrl.u32 %v2216, 7
    %v2218 = vsub.s32 0, %v2217
    %v2219 = vrot.slane %v1778, %v2218
    %v2284 = vmul.f32 %v41, %v1967
    %v2285 = vmul.f32 %v42, %v1967
    %v2286 = vmul.f32 %v43, %v1971
    %v2287 = vmul.f32 %v44, %v1971
    %v2288 = vmul.f32 %v45, %v1975
    %v2289 = vmul.f32 %v46, %v1975
    %v2290 = vmul.f32 %v47, %v1979
    %v2291 = vmul.f32 %v48, %v1979
    %v2292 = vmul.f32 %v49, %v1983
    %v2293 = vmul.f32 %v50, %v1983
    %v2294 = vmul.f32 %v51, %v1987
    %v2295 = vmul.f32 %v52, %v1987
    %v2296 = vmul.f32 %v53, %v1991
    %v2297 = vmul.f32 %v54, %v1991
    %v2298 = vmul.f32 %v55, %v1995
    %v2299 = vmul.f32 %v56, %v1995
    %v2300 = vmul.f32 %v57, %v1999
    %v2301 = vmul.f32 %v58, %v1999
    %v2302 = vmul.f32 %v59, %v2003
    %v2303 = vmul.f32 %v60, %v2003
    %v2304 = vmul.f32 %v61, %v2007
    %v2305 = vmul.f32 %v62, %v2007
    %v2306 = vmul.f32 %v63, %v2011
    %v2307 = vmul.f32 %v64, %v2011
    %v2308 = vmul.f32 %v65, %v2015
    %v2309 = vmul.f32 %v66, %v2015
    %v2310 = vmul.f32 %v67, %v2019
    %v2311 = vmul.f32 %v68, %v2019
    %v2312 = vmul.f32 %v69, %v2023
    %v2313 = vmul.f32 %v70, %v2023
    %v2314 = vmul.f32 %v71, %v2027
    %v2315 = vmul.f32 %v72, %v2027
    %v2316 = vmul.f32 %v73, %v2031
    %v2317 = vmul.f32 %v74, %v2031
    %v2318 = vmul.f32 %v75, %v2035
    %v2319 = vmul.f32 %v76, %v2035
    %v2320 = vmul.f32 %v77, %v2039
    %v2321 = vmul.f32 %v78, %v2039
    %v2322 = vmul.f32 %v79, %v2043
    %v2323 = vmul.f32 %v80, %v2043
    %v2324 = vmul.f32 %v81, %v2047
    %v2325 = vmul.f32 %v82, %v2047
    %v2326 = vmul.f32 %v83, %v2051
    %v2327 = vmul.f32 %v84, %v2051
    %v2328 = vmul.f32 %v85, %v2055
    %v2329 = vmul.f32 %v86, %v2055
    %v2330 = vmul.f32 %v87, %v2059
    %v2331 = vmul.f32 %v88, %v2059
    %v2332 = vmul.f32 %v89, %v2063
    %v2333 = vmul.f32 %v90, %v2063
    %v2334 = vmul.f32 %v91, %v2067
    %v2335 = vmul.f32 %v92, %v2067
    %v2336 = vmul.f32 %v93, %v2071
    %v2337 = vmul.f32 %v94, %v2071
    %v2338 = vmul.f32 %v95, %v2075
    %v2339 = vmul.f32 %v96, %v2075
    %v2340 = vmul.f32 %v97, %v2079
    %v2341 = vmul.f32 %v98, %v2079
    %v2342 = vmul.f32 %v99, %v2083
    %v2343 = vmul.f32 %v100, %v2083
    %v2344 = vmul.f32 %v101, %v2087
    %v2345 = vmul.f32 %v102, %v2087
    %v2346 = vmul.f32 %v103, %v2091
    %v2347 = vmul.f32 %v104, %v2091
    %v2348 = vmul.f32 %v105, %v2095
    %v2349 = vmul.f32 %v106, %v2095
    %v2350 = vmul.f32 %v107, %v2099
    %v2351 = vmul.f32 %v108, %v2099
    %v2352 = vmul.f32 %v109, %v2103
    %v2353 = vmul.f32 %v110, %v2103
    %v2354 = vmul.f32 %v111, %v2107
    %v2355 = vmul.f32 %v112, %v2107
    %v2356 = vmul.f32 %v113, %v2111
    %v2357 = vmul.f32 %v114, %v2111
    %v2358 = vmul.f32 %v115, %v2115
    %v2359 = vmul.f32 %v116, %v2115
    %v2360 = vmul.f32 %v117, %v2119
    %v2361 = vmul.f32 %v118, %v2119
    %v2362 = vmul.f32 %v119, %v2123
    %v2363 = vmul.f32 %v120, %v2123
    %v2364 = vmul.f32 %v121, %v2127
    %v2365 = vmul.f32 %v122, %v2127
    %v2366 = vmul.f32 %v123, %v2131
    %v2367 = vmul.f32 %v124, %v2131
    %v2368 = vmul.f32 %v125, %v2135
    %v2369 = vmul.f32 %v126, %v2135
    %v2370 = vmul.f32 %v127, %v2139
    %v2371 = vmul.f32 %v128, %v2139
    %v2372 = vmul.f32 %v129, %v2143
    %v2373 = vmul.f32 %v130, %v2143
    %v2374 = vmul.f32 %v131, %v2147
    %v2375 = vmul.f32 %v132, %v2147
    %v2376 = vmul.f32 %v133, %v2151
    %v2377 = vmul.f32 %v134, %v2151
    %v2378 = vmul.f32 %v135, %v2155
    %v2379 = vmul.f32 %v136, %v2155
    %v2380 = vmul.f32 %v137, %v2159
    %v2381 = vmul.f32 %v138, %v2159
    %v2382 = vmul.f32 %v139, %v2163
    %v2383 = vmul.f32 %v140, %v2163
    %v2384 = vmul.f32 %v141, %v2167
    %v2385 = vmul.f32 %v142, %v2167
    %v2386 = vmul.f32 %v143, %v2171
    %v2387 = vmul.f32 %v144, %v2171
    %v2388 = vmul.f32 %v145, %v2175
    %v2389 = vmul.f32 %v146, %v2175
    %v2390 = vmul.f32 %v147, %v2179
    %v2391 = vmul.f32 %v148, %v2179
    %v2392 = vmul.f32 %v149, %v2183
    %v2393 = vmul.f32 %v150, %v2183
    %v2394 = vmul.f32 %v151, %v2187
    %v2395 = vmul.f32 %v152, %v2187
    %v2396 = vmul.f32 %v153, %v2191
    %v2397 = vmul.f32 %v154, %v2191
    %v2398 = vmul.f32 %v155, %v2195
    %v2399 = vmul.f32 %v156, %v2195
    %v2400 = vmul.f32 %v157, %v2199
    %v2401 = vmul.f32 %v158, %v2199
    %v2402 = vmul.f32 %v159, %v2203
    %v2403 = vmul.f32 %v160, %v2203
    %v2404 = vmul.f32 %v161, %v2207
    %v2405 = vmul.f32 %v162, %v2207
    %v2406 = vmul.f32 %v163, %v2211
    %v2407 = vmul.f32 %v164, %v2211
    %v2408 = vmul.f32 %v165, %v2215
    %v2409 = vmul.f32 %v166, %v2215
    %v2410 = vmul.f32 %v167, %v2219
    %v2411 = vmul.f32 %v168, %v2219
    %v2412 = vmul.f32 %v2284, %v1949
    %v2413 = vmul.f32 %v2285, %v1951
    %v2414 = vmul.f32 %v2286, %v1949
    %v2415 = vmul.f32 %v2287, %v1951
    %v2416 = vmul.f32 %v2288, %v1949
    %v2417 = vmul.f32 %v2289, %v1951
    %v2418 = vmul.f32 %v2290, %v1949
    %v2419 = vmul.f32 %v2291, %v1951
    %v2420 = vmul.f32 %v2292, %v1949
    %v2421 = vmul.f32 %v2293, %v1951
    %v2422 = vmul.f32 %v2294, %v1949
    %v2423 = vmul.f32 %v2295, %v1951
    %v2424 = vmul.f32 %v2296, %v1949
    %v2425 = vmul.f32 %v2297, %v1951
    %v2426 = vmul.f32 %v2298, %v1949
    %v2427 = vmul.f32 %v2299, %v1951
    %v2428 = vmul.f32 %v2300, %v1949
    %v2429 = vmul.f32 %v2301, %v1951
    %v2430 = vmul.f32 %v2302, %v1949
    %v2431 = vmul.f32 %v2303, %v1951
    %v2432 = vmul.f32 %v2304, %v1949
    %v2433 = vmul.f32 %v2305, %v1951
    %v2434 = vmul.f32 %v2306, %v1949
    %v2435 = vmul.f32 %v2307, %v1951
    %v2436 = vmul.f32 %v2308, %v1949
    %v2437 = vmul.f32 %v2309, %v1951
    %v2438 = vmul.f32 %v2310, %v1949
    %v2439 = vmul.f32 %v2311, %v1951
    %v2440 = vmul.f32 %v2312, %v1949
    %v2441 = vmul.f32 %v2313, %v1951
    %v2442 = vmul.f32 %v2314, %v1949
    %v2443 = vmul.f32 %v2315, %v1951
    %v2444 = vmul.f32 %v2316, %v1953
    %v2445 = vmul.f32 %v2317, %v1955
    %v2446 = vmul.f32 %v2318, %v1953
    %v2447 = vmul.f32 %v2319, %v1955
    %v2448 = vmul.f32 %v2320, %v1953
    %v2449 = vmul.f32 %v2321, %v1955
    %v2450 = vmul.f32 %v2322, %v1953
    %v2451 = vmul.f32 %v2323, %v1955
    %v2452 = vmul.f32 %v2324, %v1953
    %v2453 = vmul.f32 %v2325, %v1955
    %v2454 = vmul.f32 %v2326, %v1953
    %v2455 = vmul.f32 %v2327, %v1955
    %v2456 = vmul.f32 %v2328, %v1953
    %v2457 = vmul.f32 %v2329, %v1955
    %v2458 = vmul.f32 %v2330, %v1953
    %v2459 = vmul.f32 %v2331, %v1955
    %v2460 = vmul.f32 %v2332, %v1953
    %v2461 = vmul.f32 %v2333, %v1955
    %v2462 = vmul.f32 %v2334, %v1953
    %v2463 = vmul.f32 %v2335, %v1955
    %v2464 = vmul.f32 %v2336, %v1953
    %v2465 = vmul.f32 %v2337, %v1955
    %v2466 = vmul.f32 %v2338, %v1953
    %v2467 = vmul.f32 %v2339, %v1955
    %v2468 = vmul.f32 %v2340, %v1953
    %v2469 = vmul.f32 %v2341, %v1955
    %v2470 = vmul.f32 %v2342, %v1953
    %v2471 = vmul.f32 %v2343, %v1955
    %v2472 = vmul.f32 %v2344, %v1953
    %v2473 = vmul.f32 %v2345, %v1955
    %v2474 = vmul.f32 %v2346, %v1953
    %v2475 = vmul.f32 %v2347, %v1955
    %v2476 = vmul.f32 %v2348, %v1957
    %v2477 = vmul.f32 %v2349, %v1959
    %v2478 = vmul.f32 %v2350, %v1957
    %v2479 = vmul.f32 %v2351, %v1959
    %v2480 = vmul.f32 %v2352, %v1957
    %v2481 = vmul.f32 %v2353, %v1959
    %v2482 = vmul.f32 %v2354, %v1957
    %v2483 = vmul.f32 %v2355, %v1959
    %v2484 = vmul.f32 %v2356, %v1957
    %v2485 = vmul.f32 %v2357, %v1959
    %v2486 = vmul.f32 %v2358, %v1957
    %v2487 = vmul.f32 %v2359, %v1959
    %v2488 = vmul.f32 %v2360, %v1957
    %v2489 = vmul.f32 %v2361, %v1959
    %v2490 = vmul.f32 %v2362, %v1957
    %v2491 = vmul.f32 %v2363, %v1959
    %v2492 = vmul.f32 %v2364, %v1957
    %v2493 = vmul.f32 %v2365, %v1959
    %v2494 = vmul.f32 %v2366, %v1957
    %v2495 = vmul.f32 %v2367, %v1959
    %v2496 = vmul.f32 %v2368, %v1957
    %v2497 = vmul.f32 %v2369, %v1959
    %v2498 = vmul.f32 %v2370, %v1957
    %v2499 = vmul.f32 %v2371, %v1959
    %v2500 = vmul.f32 %v2372, %v1957
    %v2501 = vmul.f32 %v2373, %v1959
    %v2502 = vmul.f32 %v2374, %v1957
    %v2503 = vmul.f32 %v2375, %v1959
    %v2504 = vmul.f32 %v2376, %v1957
    %v2505 = vmul.f32 %v2377, %v1959
    %v2506 = vmul.f32 %v2378, %v1957
    %v2507 = vmul.f32 %v2379, %v1959
    %v2508 = vmul.f32 %v2380, %v1961
    %v2509 = vmul.f32 %v2381, %v1963
    %v2510 = vmul.f32 %v2382, %v1961
    %v2511 = vmul.f32 %v2383, %v1963
    %v2512 = vmul.f32 %v2384, %v1961
    %v2513 = vmul.f32 %v2385, %v1963
    %v2514 = vmul.f32 %v2386, %v1961
    %v2515 = vmul.f32 %v2387, %v1963
    %v2516 = vmul.f32 %v2388, %v1961
    %v2517 = vmul.f32 %v2389, %v1963
    %v2518 = vmul.f32 %v2390, %v1961
    %v2519 = vmul.f32 %v2391, %v1963
    %v2520 = vmul.f32 %v2392, %v1961
    %v2521 = vmul.f32 %v2393, %v1963
    %v2522 = vmul.f32 %v2394, %v1961
    %v2523 = vmul.f32 %v2395, %v1963
    %v2524 = vmul.f32 %v2396, %v1961
    %v2525 = vmul.f32 %v2397, %v1963
    %v2526 = vmul.f32 %v2398, %v1961
    %v2527 = vmul.f32 %v2399, %v1963
    %v2528 = vmul.f32 %v2400, %v1961
    %v2529 = vmul.f32 %v2401, %v1963
    %v2530 = vmul.f32 %v2402, %v1961
    %v2531 = vmul.f32 %v2403, %v1963
    %v2532 = vmul.f32 %v2404, %v1961
    %v2533 = vmul.f32 %v2405, %v1963
    %v2534 = vmul.f32 %v2406, %v1961
    %v2535 = vmul.f32 %v2407, %v1963
    %v2536 = vmul.f32 %v2408, %v1961
    %v2537 = vmul.f32 %v2409, %v1963
    %v2538 = vmul.f32 %v2410, %v1961
    %v2539 = vmul.f32 %v2411, %v1963
    %2540 = vst [vmem:[#allocation5] sm:$0xff] %v2412
    %2541 = vst [vmem:[#allocation5 + $0x8] sm:$0xff] %v2413
    %2542 = vst [vmem:[#allocation5 + $0x10] sm:$0xff] %v2414
    %2543 = vst [vmem:[#allocation5 + $0x18] sm:$0xff] %v2415
    %2544 = vst [vmem:[#allocation5 + $0x20] sm:$0xff] %v2416
    %2545 = vst [vmem:[#allocation5 + $0x28] sm:$0xff] %v2417
    %2546 = vst [vmem:[#allocation5 + $0x30] sm:$0xff] %v2418
    %2547 = vst [vmem:[#allocation5 + $0x38] sm:$0xff] %v2419
    %2548 = vst [vmem:[#allocation5 + $0x40] sm:$0xff] %v2420
    %2549 = vst [vmem:[#allocation5 + $0x48] sm:$0xff] %v2421
    %2550 = vst [vmem:[#allocation5 + $0x50] sm:$0xff] %v2422
    %2551 = vst [vmem:[#allocation5 + $0x58] sm:$0xff] %v2423
    %2552 = vst [vmem:[#allocation5 + $0x60] sm:$0xff] %v2424
    %2553 = vst [vmem:[#allocation5 + $0x68] sm:$0xff] %v2425
    %2554 = vst [vmem:[#allocation5 + $0x70] sm:$0xff] %v2426
    %2555 = vst [vmem:[#allocation5 + $0x78] sm:$0xff] %v2427
    %2556 = vst [vmem:[#allocation5 + $0x80] sm:$0xff] %v2428
    %2557 = vst [vmem:[#allocation5 + $0x88] sm:$0xff] %v2429
    %2558 = vst [vmem:[#allocation5 + $0x90] sm:$0xff] %v2430
    %2559 = vst [vmem:[#allocation5 + $0x98] sm:$0xff] %v2431
    %2560 = vst [vmem:[#allocation5 + $0xa0] sm:$0xff] %v2432
    %2561 = vst [vmem:[#allocation5 + $0xa8] sm:$0xff] %v2433
    %2562 = vst [vmem:[#allocation5 + $0xb0] sm:$0xff] %v2434
    %2563 = vst [vmem:[#allocation5 + $0xb8] sm:$0xff] %v2435
    %2564 = vst [vmem:[#allocation5 + $0xc0] sm:$0xff] %v2436
    %2565 = vst [vmem:[#allocation5 + $0xc8] sm:$0xff] %v2437
    %2566 = vst [vmem:[#allocation5 + $0xd0] sm:$0xff] %v2438
    %2567 = vst [vmem:[#allocation5 + $0xd8] sm:$0xff] %v2439
    %2568 = vst [vmem:[#allocation5 + $0xe0] sm:$0xff] %v2440
    %2569 = vst [vmem:[#allocation5 + $0xe8] sm:$0xff] %v2441
    %2570 = vst [vmem:[#allocation5 + $0xf0] sm:$0xff] %v2442
    %2571 = vst [vmem:[#allocation5 + $0xf8] sm:$0xff] %v2443
    %2572 = vst [vmem:[#allocation5 + $0x100] sm:$0xff] %v2444
    %2573 = vst [vmem:[#allocation5 + $0x108] sm:$0xff] %v2445
    %2574 = vst [vmem:[#allocation5 + $0x110] sm:$0xff] %v2446
    %2575 = vst [vmem:[#allocation5 + $0x118] sm:$0xff] %v2447
    %2576 = vst [vmem:[#allocation5 + $0x120] sm:$0xff] %v2448
    %2577 = vst [vmem:[#allocation5 + $0x128] sm:$0xff] %v2449
    %2578 = vst [vmem:[#allocation5 + $0x130] sm:$0xff] %v2450
    %2579 = vst [vmem:[#allocation5 + $0x138] sm:$0xff] %v2451
    %2580 = vst [vmem:[#allocation5 + $0x140] sm:$0xff] %v2452
    %2581 = vst [vmem:[#allocation5 + $0x148] sm:$0xff] %v2453
    %2582 = vst [vmem:[#allocation5 + $0x150] sm:$0xff] %v2454
    %2583 = vst [vmem:[#allocation5 + $0x158] sm:$0xff] %v2455
    %2584 = vst [vmem:[#allocation5 + $0x160] sm:$0xff] %v2456
    %2585 = vst [vmem:[#allocation5 + $0x168] sm:$0xff] %v2457
    %2586 = vst [vmem:[#allocation5 + $0x170] sm:$0xff] %v2458
    %2587 = vst [vmem:[#allocation5 + $0x178] sm:$0xff] %v2459
    %2588 = vst [vmem:[#allocation5 + $0x180] sm:$0xff] %v2460
    %2589 = vst [vmem:[#allocation5 + $0x188] sm:$0xff] %v2461
    %2590 = vst [vmem:[#allocation5 + $0x190] sm:$0xff] %v2462
    %2591 = vst [vmem:[#allocation5 + $0x198] sm:$0xff] %v2463
    %2592 = vst [vmem:[#allocation5 + $0x1a0] sm:$0xff] %v2464
    %2593 = vst [vmem:[#allocation5 + $0x1a8] sm:$0xff] %v2465
    %2594 = vst [vmem:[#allocation5 + $0x1b0] sm:$0xff] %v2466
    %2595 = vst [vmem:[#allocation5 + $0x1b8] sm:$0xff] %v2467
    %2596 = vst [vmem:[#allocation5 + $0x1c0] sm:$0xff] %v2468
    %2597 = vst [vmem:[#allocation5 + $0x1c8] sm:$0xff] %v2469
    %2598 = vst [vmem:[#allocation5 + $0x1d0] sm:$0xff] %v2470
    %2599 = vst [vmem:[#allocation5 + $0x1d8] sm:$0xff] %v2471
    %2600 = vst [vmem:[#allocation5 + $0x1e0] sm:$0xff] %v2472
    %2601 = vst [vmem:[#allocation5 + $0x1e8] sm:$0xff] %v2473
    %2602 = vst [vmem:[#allocation5 + $0x1f0] sm:$0xff] %v2474
    %2603 = vst [vmem:[#allocation5 + $0x1f8] sm:$0xff] %v2475
    %2604 = vst [vmem:[#allocation5 + $0x200] sm:$0xff] %v2476
    %2605 = vst [vmem:[#allocation5 + $0x208] sm:$0xff] %v2477
    %2606 = vst [vmem:[#allocation5 + $0x210] sm:$0xff] %v2478
    %2607 = vst [vmem:[#allocation5 + $0x218] sm:$0xff] %v2479
    %2608 = vst [vmem:[#allocation5 + $0x220] sm:$0xff] %v2480
    %2609 = vst [vmem:[#allocation5 + $0x228] sm:$0xff] %v2481
    %2610 = vst [vmem:[#allocation5 + $0x230] sm:$0xff] %v2482
    %2611 = vst [vmem:[#allocation5 + $0x238] sm:$0xff] %v2483
    %2612 = vst [vmem:[#allocation5 + $0x240] sm:$0xff] %v2484
    %2613 = vst [vmem:[#allocation5 + $0x248] sm:$0xff] %v2485
    %2614 = vst [vmem:[#allocation5 + $0x250] sm:$0xff] %v2486
    %2615 = vst [vmem:[#allocation5 + $0x258] sm:$0xff] %v2487
    %2616 = vst [vmem:[#allocation5 + $0x260] sm:$0xff] %v2488
    %2617 = vst [vmem:[#allocation5 + $0x268] sm:$0xff] %v2489
    %2618 = vst [vmem:[#allocation5 + $0x270] sm:$0xff] %v2490
    %2619 = vst [vmem:[#allocation5 + $0x278] sm:$0xff] %v2491
    %2620 = vst [vmem:[#allocation5 + $0x280] sm:$0xff] %v2492
    %2621 = vst [vmem:[#allocation5 + $0x288] sm:$0xff] %v2493
    %2622 = vst [vmem:[#allocation5 + $0x290] sm:$0xff] %v2494
    %2623 = vst [vmem:[#allocation5 + $0x298] sm:$0xff] %v2495
    %2624 = vst [vmem:[#allocation5 + $0x2a0] sm:$0xff] %v2496
    %2625 = vst [vmem:[#allocation5 + $0x2a8] sm:$0xff] %v2497
    %2626 = vst [vmem:[#allocation5 + $0x2b0] sm:$0xff] %v2498
    %2627 = vst [vmem:[#allocation5 + $0x2b8] sm:$0xff] %v2499
    %2628 = vst [vmem:[#allocation5 + $0x2c0] sm:$0xff] %v2500
    %2629 = vst [vmem:[#allocation5 + $0x2c8] sm:$0xff] %v2501
    %2630 = vst [vmem:[#allocation5 + $0x2d0] sm:$0xff] %v2502
    %2631 = vst [vmem:[#allocation5 + $0x2d8] sm:$0xff] %v2503
    %2632 = vst [vmem:[#allocation5 + $0x2e0] sm:$0xff] %v2504
    %2633 = vst [vmem:[#allocation5 + $0x2e8] sm:$0xff] %v2505
    %2634 = vst [vmem:[#allocation5 + $0x2f0] sm:$0xff] %v2506
    %2635 = vst [vmem:[#allocation5 + $0x2f8] sm:$0xff] %v2507
    %2636 = vst [vmem:[#allocation5 + $0x300] sm:$0xff] %v2508
    %2637 = vst [vmem:[#allocation5 + $0x308] sm:$0xff] %v2509
    %2638 = vst [vmem:[#allocation5 + $0x310] sm:$0xff] %v2510
    %2639 = vst [vmem:[#allocation5 + $0x318] sm:$0xff] %v2511
    %2640 = vst [vmem:[#allocation5 + $0x320] sm:$0xff] %v2512
    %2641 = vst [vmem:[#allocation5 + $0x328] sm:$0xff] %v2513
    %2642 = vst [vmem:[#allocation5 + $0x330] sm:$0xff] %v2514
    %2643 = vst [vmem:[#allocation5 + $0x338] sm:$0xff] %v2515
    %2644 = vst [vmem:[#allocation5 + $0x340] sm:$0xff] %v2516
    %2645 = vst [vmem:[#allocation5 + $0x348] sm:$0xff] %v2517
    %2646 = vst [vmem:[#allocation5 + $0x350] sm:$0xff] %v2518
    %2647 = vst [vmem:[#allocation5 + $0x358] sm:$0xff] %v2519
    %2648 = vst [vmem:[#allocation5 + $0x360] sm:$0xff] %v2520
    %2649 = vst [vmem:[#allocation5 + $0x368] sm:$0xff] %v2521
    %2650 = vst [vmem:[#allocation5 + $0x370] sm:$0xff] %v2522
    %2651 = vst [vmem:[#allocation5 + $0x378] sm:$0xff] %v2523
    %2652 = vst [vmem:[#allocation5 + $0x380] sm:$0xff] %v2524
    %2653 = vst [vmem:[#allocation5 + $0x388] sm:$0xff] %v2525
    %2654 = vst [vmem:[#allocation5 + $0x390] sm:$0xff] %v2526
    %2655 = vst [vmem:[#allocation5 + $0x398] sm:$0xff] %v2527
    %2656 = vst [vmem:[#allocation5 + $0x3a0] sm:$0xff] %v2528
    %2657 = vst [vmem:[#allocation5 + $0x3a8] sm:$0xff] %v2529
    %2658 = vst [vmem:[#allocation5 + $0x3b0] sm:$0xff] %v2530
    %2659 = vst [vmem:[#allocation5 + $0x3b8] sm:$0xff] %v2531
    %2660 = vst [vmem:[#allocation5 + $0x3c0] sm:$0xff] %v2532
    %2661 = vst [vmem:[#allocation5 + $0x3c8] sm:$0xff] %v2533
    %2662 = vst [vmem:[#allocation5 + $0x3d0] sm:$0xff] %v2534
    %2663 = vst [vmem:[#allocation5 + $0x3d8] sm:$0xff] %v2535
    %2664 = vst [vmem:[#allocation5 + $0x3e0] sm:$0xff] %v2536
    %2665 = vst [vmem:[#allocation5 + $0x3e8] sm:$0xff] %v2537
    %2666 = vst [vmem:[#allocation5 + $0x3f0] sm:$0xff] %v2538
    %2667 = vst [vmem:[#allocation5 + $0x3f8] sm:$0xff] %v2539
    // Predicated region
    $region34: #{tpu_custom_call.1} parent=1 // pred_check
      _
    $region35: #{tpu_custom_call.1} parent=1 // pred_check_branch
      %2669 = sbr.rel (0) target = $region37
    $region36: #{tpu_custom_call.1} parent=1 // pred_region
      %s2671 = ssub.s32 16384, 16384
      %2672 = vsyncadd [#allocation4], %s2671
      %s2673 = sshll.u32 [#allocation5], 4
      %s2674 = int_to_ptr.vmem [resolvable:$true] %s2673
      %2679 = dma.vmem_to_hbm [thread:$0]  %s2674, 16384, %s7, [#allocation4], 128, 128, 8
    $region37: #{tpu_custom_call.1} parent=1 // pred_fallthru
      _
    // Predicated region
    $region38: #{tpu_custom_call.1} parent=1 // pred_check
      _
    $region39: #{tpu_custom_call.1} parent=1 // pred_check_branch
      %2681 = sbr.rel (0) target = $region41
    $region40: #{tpu_custom_call.1} parent=1 // pred_region
      %2682 = dma.done [#allocation4], 16384
    $region41: #{tpu_custom_call.1} parent=1 // pred_fallthru
      _
    %2683 = vsyncpa [#allocation3], 1
    %2684 = vsyncpa [#allocation4], 1

</llo_original>
